<compile_context>
chip_gen: v5e
topology: v5e:2x2
jax: 0.10.0
libtpu: 0.0.40
codegen_flags: <defaults>
</compile_context>

<pallas_src>
import jax
import jax.numpy as jnp
from jax.experimental import pallas as pl
from jax.experimental.pallas import tpu as pltpu

NEG_SLOPE = 0.01   # nn.LeakyReLU default
F = 128            # padded hidden width (lane dim)


def _leaky_relu(h):
    # slope < 1  =>  max(h, slope*h) == leaky_relu(h); one vmul + one vmax.
    return jnp.maximum(h, NEG_SLOPE * h)


def _round_up(n, m):
    return ((n + m - 1) // m) * m


def _device_kind():
    try:
        return jax.devices()[0].device_kind.lower()
    except Exception:
        return ""


def _num_tensorcores_per_chip():
    """2 on v7x (the 'parallel' grid axis is sharded across cores), else 1."""
    k = _device_kind()
    return 2 if ("v7" in k or "7x" in k) else 1


def _has_bf16_valu():
    """bf16 VALU exists on v6e / v7x; v5e would emulate bf16 elementwise ops."""
    k = _device_kind()
    return any(t in k for t in ("v6", "v7", "7x"))


def _batch_tile(B, n_tc):
    """Rows per grid step.

    1-TC chips (v5e/v6e): a single grid step — the grid is a serial loop
    there and a forced split only adds step overhead + a second pipeline fill.
    2-TC chips (v7x): two balanced steps so both TensorCores get equal work.
    Capped at 2048 rows (still < 1 MiB of VMEM per step for this kernel).
    """
    if n_tc >= 2 and B >= 16:
        bt = _round_up(pl.cdiv(B, 2), 8)
    else:
        bt = _round_up(max(B, 1), 8)
    return min(bt, 2048)


def make_mlp_kernel(act_bf16):
    def mlp_kernel(x_ref, w1_ref, wr_ref, b_ref, w7_ref, o_ref):
        """7-layer MLP fused; one grid step = one batch tile of `bt` rows.

        x_ref  : (bt, C)      f32   un-padded features
        w1_ref : (C, F)       bf16  layer-1 weight, columns >= C//2 are zero
        wr_ref : (5, F, F)    bf16  layers 2..6 weights, zero-padded to 128x128
        b_ref  : (8, F)       f32   biases (row l = layer l+1), zero-padded
        w7_ref : (1, F)       f32   layer-7 weight as a row, zero-padded
        o_ref  : (bt, 1)      f32   sigmoid output (the single output unit)
        """
        biases = b_ref[...]                                   # (8, F) — one vreg

        # Layer 1: single bf16 MXU pass, f32 accumulation.  Padded output
        # lanes stay exactly zero (zero weight columns + zero bias lanes,
        # and leaky_relu(0) == 0).
        h = jnp.dot(x_ref[...].astype(jnp.bfloat16), w1_ref[...],
                    preferred_element_type=jnp.float32)
        h = _leaky_relu(h + biases[0:1, :])

        if act_bf16:
            # v6e / v7x: bf16 VALU — bias add + LeakyReLU in bf16 too
            # (halves activation vreg footprint and per-layer VPU work).
            h = h.astype(jnp.bfloat16)
            bias_b = biases.astype(jnp.bfloat16)
            for l in range(1, 6):                             # layers 2..6
                a = jnp.dot(h, wr_ref[l - 1],
                            preferred_element_type=jnp.float32)
                h = _leaky_relu(a.astype(jnp.bfloat16) + bias_b[l:l + 1, :])
            h = h.astype(jnp.float32)
        else:
            # v5e: no bf16 VALU — bf16 only on the MXU, f32 activations.
            for l in range(1, 6):                             # layers 2..6
                a = jnp.dot(h.astype(jnp.bfloat16), wr_ref[l - 1],
                            preferred_element_type=jnp.float32)
                h = _leaky_relu(a + biases[l:l + 1, :])

        # Layer 7 + sigmoid: only one real output unit, so skip the MXU and
        # use a VPU multiply + cross-lane sum (XLU/VPU have slack here).
        z = jnp.sum(h * w7_ref[...], axis=-1, keepdims=True) + biases[6:7, 0:1]
        o_ref[...] = jax.nn.sigmoid(z)

    return mlp_kernel


def init_predictor_params(reach, key):
    """Deterministic init matching PyTorch nn.Linear shapes.
    Returns list of (W, b) with W stored as (in_features, out_features)."""
    C = reach * (reach + 1) * 2 * 3 + 1 + 2 + 7
    dims = [C, C // 2, C // 4, C // 4, C // 4, C // 4, C // 4, 1]
    params = []
    for i in range(7):
        din, dout = dims[i], dims[i + 1]
        key, kw, kb = jax.random.split(key, 3)
        bound = 1.0 / jnp.sqrt(jnp.float32(din))
        w = jax.random.uniform(kw, (din, dout), jnp.float32, -bound, bound)
        b = jax.random.uniform(kb, (dout,), jnp.float32, -bound, bound)
        params.append((w, b))
    return C, params


def pack_params(params):
    """One-time (outside the hot path) pad + pack of the 7 Linear layers."""
    w1, b1 = params[0]
    C, d1 = w1.shape
    w1p = jnp.zeros((C, F), jnp.bfloat16).at[:, :d1].set(w1.astype(jnp.bfloat16))
    wr = jnp.zeros((5, F, F), jnp.bfloat16)
    bs = jnp.zeros((8, F), jnp.float32).at[0, :d1].set(b1)
    for l in range(1, 6):                         # layers 2..6 -> MXU slabs
        w, b = params[l]
        din, dout = w.shape
        wr = wr.at[l - 1, :din, :dout].set(w.astype(jnp.bfloat16))
        bs = bs.at[l, :dout].set(b)
    w7, b7 = params[6]                            # layer 7: (din, 1) -> row vector
    din7 = w7.shape[0]
    w7p = jnp.zeros((1, F), jnp.float32).at[0, :din7].set(w7[:, 0])
    bs = bs.at[6, 0].set(b7[0])
    return w1p, wr, bs, w7p


def predictor_forward(x, packed):
    """x: (B, C) float32, packed = pack_params(params).  Returns (B,) float32
    (0-d for B == 1, matching PyTorch .squeeze())."""
    w1p, wr, bs, w7p = packed
    B, C = x.shape
    bt = _batch_tile(B, _num_tensorcores_per_chip())
    Bp = _round_up(B, bt)
    xp = x if Bp == B else jnp.pad(x, ((0, Bp - B), (0, 0)))

    out = pl.pallas_call(
        make_mlp_kernel(_has_bf16_valu()),
        out_shape=jax.ShapeDtypeStruct((Bp, 1), jnp.float32),
        grid=(Bp // bt,),
        in_specs=[
            pl.BlockSpec((bt, C), lambda i: (i, 0)),        # x (lane dim = full C)
            pl.BlockSpec((C, F), lambda i: (0, 0)),         # layer-1 weight (constant)
            pl.BlockSpec((5, F, F), lambda i: (0, 0, 0)),   # layers 2-6 weights (constant)
            pl.BlockSpec((8, F), lambda i: (0, 0)),         # all biases (constant)
            pl.BlockSpec((1, F), lambda i: (0, 0)),         # layer-7 weight row (constant)
        ],
        out_specs=pl.BlockSpec((bt, 1), lambda i: (i, 0)),
        compiler_params=pltpu.CompilerParams(
            dimension_semantics=("parallel",)),
    )(xp, w1p, wr, bs, w7p)

    return jnp.squeeze(out[:B, 0])


def predictor_reference(x, params):
    h = x.astype(jnp.float32)
    for i, (w, b) in enumerate(params):
        h = h @ w + b
        h = jax.nn.sigmoid(h) if i == 6 else _leaky_relu(h)
    return jnp.squeeze(h, axis=-1)


if __name__ == "__main__":
    reach = 2                     # -> C = 2*3*2*3 + 10 = 46
    batch = 300                   # non-multiple of 8: exercises row padding and,
                                  # on v7x, the 2-step balanced "parallel" grid

    key = jax.random.PRNGKey(0)
    key, kx = jax.random.split(key)
    C, params = init_predictor_params(reach, key)
    x = jax.random.normal(kx, (batch, C), jnp.float32)

    packed = pack_params(params)                 # pad/pack weights once
    fwd = jax.jit(predictor_forward)

    y = jax.block_until_ready(fwd(x, packed))
    y_ref = predictor_reference(x, params)

    assert y.shape == (batch,)
    max_err = float(jnp.max(jnp.abs(y - y_ref)))
    # bf16 weights everywhere (+ bf16 activations on v6e/v7x) vs f32 reference.
    assert max_err < 5e-2, max_err

    print("KERNEL_OK")
</pallas_src>

<mosaic_0001>
module attributes {stable_mosaic.version = 11 : i64} {
  func.func @mlp_kernel(%arg0: i32, %arg1: memref<304x46xf32, #tpu.memory_space<vmem>>, %arg2: memref<46x128xbf16, #tpu.memory_space<vmem>>, %arg3: memref<5x128x128xbf16, #tpu.memory_space<vmem>>, %arg4: memref<8x128xf32, #tpu.memory_space<vmem>>, %arg5: memref<1x128xf32, #tpu.memory_space<vmem>>, %arg6: memref<304x1xf32, #tpu.memory_space<vmem>>) attributes {dimension_semantics = [#tpu.dimension_semantics<parallel>], iteration_bounds = array<i64: 1>, scalar_prefetch = 0 : i64, scratch_operands = 0 : i64, tpu.core_type = #tpu.core_type<tc>, window_params = [{transform_indices = @transform_0, window_bounds = array<i64: 304, 46>}, {pipeline_mode = #tpu.pipeline_mode<synchronous>, transform_indices = @transform_1, window_bounds = array<i64: 46, 128>}, {pipeline_mode = #tpu.pipeline_mode<synchronous>, transform_indices = @transform_2, window_bounds = array<i64: 5, 128, 128>}, {pipeline_mode = #tpu.pipeline_mode<synchronous>, transform_indices = @transform_3, window_bounds = array<i64: 8, 128>}, {pipeline_mode = #tpu.pipeline_mode<synchronous>, transform_indices = @transform_4, window_bounds = array<i64: 1, 128>}, {transform_indices = @transform_5, window_bounds = array<i64: 304, 1>}]} {
    %c0 = arith.constant 0 : index
    %c0_0 = arith.constant 0 : index
    %0 = vector.load %arg4[%c0, %c0_0] : memref<8x128xf32, #tpu.memory_space<vmem>>, vector<8x128xf32>
    %c0_1 = arith.constant 0 : index
    %c0_2 = arith.constant 0 : index
    %1 = vector.load %arg1[%c0_1, %c0_2] : memref<304x46xf32, #tpu.memory_space<vmem>>, vector<304x46xf32>
    %2 = arith.truncf %1 : vector<304x46xf32> to vector<304x46xbf16>
    %c0_3 = arith.constant 0 : index
    %c0_4 = arith.constant 0 : index
    %3 = vector.load %arg2[%c0_3, %c0_4] : memref<46x128xbf16, #tpu.memory_space<vmem>>, vector<46x128xbf16>
    %cst = arith.constant dense<0.000000e+00> : vector<304x128xf32>
    %4 = tpu.matmul %2, %3, %cst {dimension_numbers = #tpu.dot_dimension_numbers<[1], [0], [0], [1], [0, 0, 1, 1], [], []>} : vector<304x46xbf16>, vector<46x128xbf16>, vector<304x128xf32> -> vector<304x128xf32>
    %5 = vector.extract_strided_slice %0 {offsets = [0, 0], sizes = [1, 128], strides = [1, 1]} : vector<8x128xf32> to vector<1x128xf32>
    %6 = vector.broadcast %5 : vector<1x128xf32> to vector<304x128xf32>
    %7 = arith.addf %4, %6 : vector<304x128xf32>
    %cst_5 = arith.constant 0.00999999977 : f32
    %8 = vector.broadcast %cst_5 : f32 to vector<304x128xf32>
    %9 = arith.mulf %8, %7 : vector<304x128xf32>
    %10 = arith.maximumf %7, %9 : vector<304x128xf32>
    %11 = arith.truncf %10 : vector<304x128xf32> to vector<304x128xbf16>
    %c0_6 = arith.constant 0 : index
    %c0_7 = arith.constant 0 : index
    %c0_8 = arith.constant 0 : index
    %12 = vector.load %arg3[%c0_6, %c0_7, %c0_8] : memref<5x128x128xbf16, #tpu.memory_space<vmem>>, vector<1x128x128xbf16>
    %13 = vector.shape_cast %12 : vector<1x128x128xbf16> to vector<128x128xbf16>
    %cst_9 = arith.constant dense<0.000000e+00> : vector<304x128xf32>
    %14 = tpu.matmul %11, %13, %cst_9 {dimension_numbers = #tpu.dot_dimension_numbers<[1], [0], [0], [1], [0, 0, 1, 1], [], []>} : vector<304x128xbf16>, vector<128x128xbf16>, vector<304x128xf32> -> vector<304x128xf32>
    %15 = vector.extract_strided_slice %0 {offsets = [1, 0], sizes = [1, 128], strides = [1, 1]} : vector<8x128xf32> to vector<1x128xf32>
    %16 = vector.broadcast %15 : vector<1x128xf32> to vector<304x128xf32>
    %17 = arith.addf %14, %16 : vector<304x128xf32>
    %cst_10 = arith.constant 0.00999999977 : f32
    %18 = vector.broadcast %cst_10 : f32 to vector<304x128xf32>
    %19 = arith.mulf %18, %17 : vector<304x128xf32>
    %20 = arith.maximumf %17, %19 : vector<304x128xf32>
    %21 = arith.truncf %20 : vector<304x128xf32> to vector<304x128xbf16>
    %c1 = arith.constant 1 : index
    %c0_11 = arith.constant 0 : index
    %c0_12 = arith.constant 0 : index
    %22 = vector.load %arg3[%c1, %c0_11, %c0_12] : memref<5x128x128xbf16, #tpu.memory_space<vmem>>, vector<1x128x128xbf16>
    %23 = vector.shape_cast %22 : vector<1x128x128xbf16> to vector<128x128xbf16>
    %cst_13 = arith.constant dense<0.000000e+00> : vector<304x128xf32>
    %24 = tpu.matmul %21, %23, %cst_13 {dimension_numbers = #tpu.dot_dimension_numbers<[1], [0], [0], [1], [0, 0, 1, 1], [], []>} : vector<304x128xbf16>, vector<128x128xbf16>, vector<304x128xf32> -> vector<304x128xf32>
    %25 = vector.extract_strided_slice %0 {offsets = [2, 0], sizes = [1, 128], strides = [1, 1]} : vector<8x128xf32> to vector<1x128xf32>
    %26 = vector.broadcast %25 : vector<1x128xf32> to vector<304x128xf32>
    %27 = arith.addf %24, %26 : vector<304x128xf32>
    %cst_14 = arith.constant 0.00999999977 : f32
    %28 = vector.broadcast %cst_14 : f32 to vector<304x128xf32>
    %29 = arith.mulf %28, %27 : vector<304x128xf32>
    %30 = arith.maximumf %27, %29 : vector<304x128xf32>
    %31 = arith.truncf %30 : vector<304x128xf32> to vector<304x128xbf16>
    %c2 = arith.constant 2 : index
    %c0_15 = arith.constant 0 : index
    %c0_16 = arith.constant 0 : index
    %32 = vector.load %arg3[%c2, %c0_15, %c0_16] : memref<5x128x128xbf16, #tpu.memory_space<vmem>>, vector<1x128x128xbf16>
    %33 = vector.shape_cast %32 : vector<1x128x128xbf16> to vector<128x128xbf16>
    %cst_17 = arith.constant dense<0.000000e+00> : vector<304x128xf32>
    %34 = tpu.matmul %31, %33, %cst_17 {dimension_numbers = #tpu.dot_dimension_numbers<[1], [0], [0], [1], [0, 0, 1, 1], [], []>} : vector<304x128xbf16>, vector<128x128xbf16>, vector<304x128xf32> -> vector<304x128xf32>
    %35 = vector.extract_strided_slice %0 {offsets = [3, 0], sizes = [1, 128], strides = [1, 1]} : vector<8x128xf32> to vector<1x128xf32>
    %36 = vector.broadcast %35 : vector<1x128xf32> to vector<304x128xf32>
    %37 = arith.addf %34, %36 : vector<304x128xf32>
    %cst_18 = arith.constant 0.00999999977 : f32
    %38 = vector.broadcast %cst_18 : f32 to vector<304x128xf32>
    %39 = arith.mulf %38, %37 : vector<304x128xf32>
    %40 = arith.maximumf %37, %39 : vector<304x128xf32>
    %41 = arith.truncf %40 : vector<304x128xf32> to vector<304x128xbf16>
    %c3 = arith.constant 3 : index
    %c0_19 = arith.constant 0 : index
    %c0_20 = arith.constant 0 : index
    %42 = vector.load %arg3[%c3, %c0_19, %c0_20] : memref<5x128x128xbf16, #tpu.memory_space<vmem>>, vector<1x128x128xbf16>
    %43 = vector.shape_cast %42 : vector<1x128x128xbf16> to vector<128x128xbf16>
    %cst_21 = arith.constant dense<0.000000e+00> : vector<304x128xf32>
    %44 = tpu.matmul %41, %43, %cst_21 {dimension_numbers = #tpu.dot_dimension_numbers<[1], [0], [0], [1], [0, 0, 1, 1], [], []>} : vector<304x128xbf16>, vector<128x128xbf16>, vector<304x128xf32> -> vector<304x128xf32>
    %45 = vector.extract_strided_slice %0 {offsets = [4, 0], sizes = [1, 128], strides = [1, 1]} : vector<8x128xf32> to vector<1x128xf32>
    %46 = vector.broadcast %45 : vector<1x128xf32> to vector<304x128xf32>
    %47 = arith.addf %44, %46 : vector<304x128xf32>
    %cst_22 = arith.constant 0.00999999977 : f32
    %48 = vector.broadcast %cst_22 : f32 to vector<304x128xf32>
    %49 = arith.mulf %48, %47 : vector<304x128xf32>
    %50 = arith.maximumf %47, %49 : vector<304x128xf32>
    %51 = arith.truncf %50 : vector<304x128xf32> to vector<304x128xbf16>
    %c4 = arith.constant 4 : index
    %c0_23 = arith.constant 0 : index
    %c0_24 = arith.constant 0 : index
    %52 = vector.load %arg3[%c4, %c0_23, %c0_24] : memref<5x128x128xbf16, #tpu.memory_space<vmem>>, vector<1x128x128xbf16>
    %53 = vector.shape_cast %52 : vector<1x128x128xbf16> to vector<128x128xbf16>
    %cst_25 = arith.constant dense<0.000000e+00> : vector<304x128xf32>
    %54 = tpu.matmul %51, %53, %cst_25 {dimension_numbers = #tpu.dot_dimension_numbers<[1], [0], [0], [1], [0, 0, 1, 1], [], []>} : vector<304x128xbf16>, vector<128x128xbf16>, vector<304x128xf32> -> vector<304x128xf32>
    %55 = vector.extract_strided_slice %0 {offsets = [5, 0], sizes = [1, 128], strides = [1, 1]} : vector<8x128xf32> to vector<1x128xf32>
    %56 = vector.broadcast %55 : vector<1x128xf32> to vector<304x128xf32>
    %57 = arith.addf %54, %56 : vector<304x128xf32>
    %cst_26 = arith.constant 0.00999999977 : f32
    %58 = vector.broadcast %cst_26 : f32 to vector<304x128xf32>
    %59 = arith.mulf %58, %57 : vector<304x128xf32>
    %60 = arith.maximumf %57, %59 : vector<304x128xf32>
    %c0_27 = arith.constant 0 : index
    %c0_28 = arith.constant 0 : index
    %61 = vector.load %arg5[%c0_27, %c0_28] : memref<1x128xf32, #tpu.memory_space<vmem>>, vector<1x128xf32>
    %62 = vector.broadcast %61 : vector<1x128xf32> to vector<304x128xf32>
    %63 = arith.mulf %60, %62 : vector<304x128xf32>
    %cst_29 = arith.constant dense<0.000000e+00> : vector<304xf32>
    %64 = vector.multi_reduction <add>, %63, %cst_29 [1] : vector<304x128xf32> to vector<304xf32>
    %65 = vector.shape_cast %64 : vector<304xf32> to vector<304x1xf32>
    %66 = vector.extract_strided_slice %0 {offsets = [6, 0], sizes = [1, 1], strides = [1, 1]} : vector<8x128xf32> to vector<1x1xf32>
    %67 = vector.broadcast %66 : vector<1x1xf32> to vector<304x1xf32>
    %68 = arith.addf %65, %67 : vector<304x1xf32>
    %69 = arith.negf %68 : vector<304x1xf32>
    %70 = math.exp %69 : vector<304x1xf32>
    %cst_30 = arith.constant 1.000000e+00 : f32
    %71 = vector.broadcast %cst_30 : f32 to vector<304x1xf32>
    %72 = arith.addf %71, %70 : vector<304x1xf32>
    %73 = arith.divf %71, %72 : vector<304x1xf32>
    %c0_31 = arith.constant 0 : index
    %c0_32 = arith.constant 0 : index
    %74 = vector.load %arg6[%c0_31, %c0_32] : memref<304x1xf32, #tpu.memory_space<vmem>>, vector<304x1xf32>
    tpu.vector_store %arg6[%c0_31, %c0_32], %73 {strides = array<i32>} : memref<304x1xf32, #tpu.memory_space<vmem>>, vector<304x1xf32>,
    return
  }
  func.func @transform_0(%arg0: i32) -> (i32, i32) {
    %c0_i32 = arith.constant 0 : i32
    %c0_i32_0 = arith.constant 0 : i32
    return %arg0, %c0_i32 : i32, i32
  }
  func.func @transform_1(%arg0: i32) -> (i32, i32) {
    %c0_i32 = arith.constant 0 : i32
    %c0_i32_0 = arith.constant 0 : i32
    %c0_i32_1 = arith.constant 0 : i32
    return %c0_i32, %c0_i32_0 : i32, i32
  }
  func.func @transform_2(%arg0: i32) -> (i32, i32, i32) {
    %c0_i32 = arith.constant 0 : i32
    %c0_i32_0 = arith.constant 0 : i32
    %c0_i32_1 = arith.constant 0 : i32
    %c0_i32_2 = arith.constant 0 : i32
    return %c0_i32, %c0_i32_0, %c0_i32_1 : i32, i32, i32
  }
  func.func @transform_3(%arg0: i32) -> (i32, i32) {
    %c0_i32 = arith.constant 0 : i32
    %c0_i32_0 = arith.constant 0 : i32
    %c0_i32_1 = arith.constant 0 : i32
    return %c0_i32, %c0_i32_0 : i32, i32
  }
  func.func @transform_4(%arg0: i32) -> (i32, i32) {
    %c0_i32 = arith.constant 0 : i32
    %c0_i32_0 = arith.constant 0 : i32
    %c0_i32_1 = arith.constant 0 : i32
    return %c0_i32, %c0_i32_0 : i32, i32
  }
  func.func @transform_5(%arg0: i32) -> (i32, i32) {
    %c0_i32 = arith.constant 0 : i32
    %c0_i32_0 = arith.constant 0 : i32
    return %arg0, %c0_i32 : i32, i32
  }
}

</mosaic_0001>

<llo_original>
// kernel: predictor_forward.1
$region0: #{predictor_forward.1}
  #allocation0 [shape = 'u32[]', space=smem, size = 0x4, offset = 0x4, fixed_abs, tag = 'smem constant byte address 0x4 - core index']
  #allocation1 [shape = 'u32[72,128]{1,0:T(1,128)}', space=vmem, size = 0x9000, scoped, tag = 'internal scratch']
  %s0 = inlined_call_operand.vmem [shape: f32[304,46], index: 0, kind: input, shape index: {}]
  %s1 = inlined_call_operand.vmem [shape: bf16[46,128], index: 1, kind: input, shape index: {}]
  %s2 = inlined_call_operand.vmem [shape: bf16[5,128,128], index: 2, kind: input, shape index: {}]
  %s3 = inlined_call_operand.vmem [shape: f32[8,128], index: 3, kind: input, shape index: {}]
  %s4 = inlined_call_operand.vmem [shape: f32[1,128], index: 4, kind: input, shape index: {}]
  %s5 = inlined_call_operand.vmem [shape: f32[304,1], index: 5, kind: output, shape index: {}]
  %s6 = sld [smem:[#allocation0]]
  $region30: #{predictor_forward.1} parent=0
    _
  %s8 = ssub.s32 1, %s6
  %s9 = scalar_select 0, %s8, %s6
  // Predicated region
  $region2: #{predictor_forward.1} parent=0 // pred_check
    _
  $region3: #{predictor_forward.1} parent=0 // pred_check_branch
    %11 = sbr.rel (0) target = $region5
  $region4: #{predictor_forward.1} parent=0 // pred_region
    _
  $region5: #{predictor_forward.1} parent=0 // pred_fallthru
    _
  // Predicated region
  $region6: #{predictor_forward.1} parent=0 // pred_check
    _
  $region7: #{predictor_forward.1} parent=0 // pred_check_branch
    %13 = sbr.rel (0) target = $region9
  $region8: #{predictor_forward.1} parent=0 // pred_region
    _
  $region9: #{predictor_forward.1} parent=0 // pred_fallthru
    _
  // Predicated region
  $region10: #{predictor_forward.1} parent=0 // pred_check
    _
  $region11: #{predictor_forward.1} parent=0 // pred_check_branch
    %15 = sbr.rel (0) target = $region13
  $region12: #{predictor_forward.1} parent=0 // pred_region
    _
  $region13: #{predictor_forward.1} parent=0 // pred_fallthru
    _
  // Predicated region
  $region14: #{predictor_forward.1} parent=0 // pred_check
    _
  $region15: #{predictor_forward.1} parent=0 // pred_check_branch
    %17 = sbr.rel (0) target = $region17
  $region16: #{predictor_forward.1} parent=0 // pred_region
    _
  $region17: #{predictor_forward.1} parent=0 // pred_fallthru
    _
  // Predicated region
  $region18: #{predictor_forward.1} parent=0 // pred_check
    _
  $region19: #{predictor_forward.1} parent=0 // pred_check_branch
    %19 = sbr.rel (0) target = $region21
  $region20: #{predictor_forward.1} parent=0 // pred_region
    _
  $region21: #{predictor_forward.1} parent=0 // pred_fallthru
    _
  %v21 = vld [vmem:[%s3] sm:$0xff]
  %v22 = vld [vmem:[%s0] sm:$0xff]
  %v23 = vld [vmem:[%s0 + $0x8] sm:$0xff]
  %v24 = vld [vmem:[%s0 + $0x10] sm:$0xff]
  %v25 = vld [vmem:[%s0 + $0x18] sm:$0xff]
  %v26 = vld [vmem:[%s0 + $0x20] sm:$0xff]
  %v27 = vld [vmem:[%s0 + $0x28] sm:$0xff]
  %v28 = vld [vmem:[%s0 + $0x30] sm:$0xff]
  %v29 = vld [vmem:[%s0 + $0x38] sm:$0xff]
  %v30 = vld [vmem:[%s0 + $0x40] sm:$0xff]
  %v31 = vld [vmem:[%s0 + $0x48] sm:$0xff]
  %v32 = vld [vmem:[%s0 + $0x50] sm:$0xff]
  %v33 = vld [vmem:[%s0 + $0x58] sm:$0xff]
  %v34 = vld [vmem:[%s0 + $0x60] sm:$0xff]
  %v35 = vld [vmem:[%s0 + $0x68] sm:$0xff]
  %v36 = vld [vmem:[%s0 + $0x70] sm:$0xff]
  %v37 = vld [vmem:[%s0 + $0x78] sm:$0xff]
  %v38 = vld [vmem:[%s0 + $0x80] sm:$0xff]
  %v39 = vld [vmem:[%s0 + $0x88] sm:$0xff]
  %v40 = vld [vmem:[%s0 + $0x90] sm:$0xff]
  %v41 = vld [vmem:[%s0 + $0x98] sm:$0xff]
  %v42 = vld [vmem:[%s0 + $0xa0] sm:$0xff]
  %v43 = vld [vmem:[%s0 + $0xa8] sm:$0xff]
  %v44 = vld [vmem:[%s0 + $0xb0] sm:$0xff]
  %v45 = vld [vmem:[%s0 + $0xb8] sm:$0xff]
  %v46 = vld [vmem:[%s0 + $0xc0] sm:$0xff]
  %v47 = vld [vmem:[%s0 + $0xc8] sm:$0xff]
  %v48 = vld [vmem:[%s0 + $0xd0] sm:$0xff]
  %v49 = vld [vmem:[%s0 + $0xd8] sm:$0xff]
  %v50 = vld [vmem:[%s0 + $0xe0] sm:$0xff]
  %v51 = vld [vmem:[%s0 + $0xe8] sm:$0xff]
  %v52 = vld [vmem:[%s0 + $0xf0] sm:$0xff]
  %v53 = vld [vmem:[%s0 + $0xf8] sm:$0xff]
  %v54 = vld [vmem:[%s0 + $0x100] sm:$0xff]
  %v55 = vld [vmem:[%s0 + $0x108] sm:$0xff]
  %v56 = vld [vmem:[%s0 + $0x110] sm:$0xff]
  %v57 = vld [vmem:[%s0 + $0x118] sm:$0xff]
  %v58 = vld [vmem:[%s0 + $0x120] sm:$0xff]
  %v59 = vld [vmem:[%s0 + $0x128] sm:$0xff]
  %v60 = vpack.c.bf16 %v23, %v22
  %v61 = vpack.c.bf16 %v25, %v24
  %v62 = vpack.c.bf16 %v27, %v26
  %v63 = vpack.c.bf16 %v29, %v28
  %v64 = vpack.c.bf16 %v31, %v30
  %v65 = vpack.c.bf16 %v33, %v32
  %v66 = vpack.c.bf16 %v35, %v34
  %v67 = vpack.c.bf16 %v37, %v36
  %v68 = vpack.c.bf16 %v39, %v38
  %v69 = vpack.c.bf16 %v41, %v40
  %v70 = vpack.c.bf16 %v43, %v42
  %v71 = vpack.c.bf16 %v45, %v44
  %v72 = vpack.c.bf16 %v47, %v46
  %v73 = vpack.c.bf16 %v49, %v48
  %v74 = vpack.c.bf16 %v51, %v50
  %v75 = vpack.c.bf16 %v53, %v52
  %v76 = vpack.c.bf16 %v55, %v54
  %v77 = vpack.c.bf16 %v57, %v56
  %v78 = vpack.c.bf16 %v59, %v58
  %v79 = vld [vmem:[%s1] sm:$0xf]
  %v80 = vld [vmem:[%s1 + $0x4] sm:$0xf]
  %v81 = vld [vmem:[%s1 + $0x8] sm:$0xf]
  %v82 = vld [vmem:[%s1 + $0xc] sm:$0xf]
  %v83 = vld [vmem:[%s1 + $0x10] sm:$0xf]
  %v84 = vld [vmem:[%s1 + $0x14] sm:$0x7]
  %v85 = vperm.slane %v21, 0
  %v92 = vunpack.c.l.b16 %v79
  %v93 = vunpack.c.l.b16 %v80
  %v94 = vunpack.c.l.b16 %v81
  %v95 = vunpack.c.l.b16 %v82
  %v96 = vunpack.c.l.b16 %v83
  %v97 = vunpack.c.l.b16 %v84
  %v98 = vpack.c.b16 %v93, %v92
  %v99 = vpack.c.b16 %v95, %v94
  %v100 = vpack.c.b16 %v97, %v96
  %vm103 = vcmask 375808
  %v105 = vsel %vm103, %v60, 0
  %v108 = vsel %vm103, %v61, 0
  %v111 = vsel %vm103, %v62, 0
  %v114 = vsel %vm103, %v63, 0
  %v117 = vsel %vm103, %v64, 0
  %v120 = vsel %vm103, %v65, 0
  %v123 = vsel %vm103, %v66, 0
  %v126 = vsel %vm103, %v67, 0
  %v129 = vsel %vm103, %v68, 0
  %v132 = vsel %vm103, %v69, 0
  %v135 = vsel %vm103, %v70, 0
  %v138 = vsel %vm103, %v71, 0
  %v141 = vsel %vm103, %v72, 0
  %v144 = vsel %vm103, %v73, 0
  %v147 = vsel %vm103, %v74, 0
  %v150 = vsel %vm103, %v75, 0
  %v153 = vsel %vm103, %v76, 0
  %v156 = vsel %vm103, %v77, 0
  %v159 = vsel %vm103, %v78, 0
  %vm161 = vcmask 1046528
  %v163 = vsel %vm161, %v100, 0
  %165 = vmatpush.bf16.msra.mxu0 0
  %166 = vmatpush.bf16.msra.mxu0 0
  %167 = vmatpush.bf16.msra.mxu0 0
  %168 = vmatpush.bf16.msra.mxu0 0
  %169 = vmatpush.bf16.msra.mxu0 0
  %170 = vmatpush.bf16.msra.mxu0 %v163
  %171 = vmatpush.bf16.msra.mxu0 %v99
  %172 = vmatpush.bf16.msra.mxu0 %v98
  %173 = vmatmul.bf16.gmra.mxu0 %v105
  %v174 = vpop.f32.mrf.mxu0
  %v175 = vadd.f32 %v85, %v174
  %v176 = vpop.f32.mrf.mxu0
  %v177 = vadd.f32 %v85, %v176
  %178 = vmatmul.bf16.gmra.mxu0 %v108
  %v179 = vpop.f32.mrf.mxu0
  %v180 = vadd.f32 %v85, %v179
  %v181 = vpop.f32.mrf.mxu0
  %v182 = vadd.f32 %v85, %v181
  %183 = vmatmul.bf16.gmra.mxu0 %v111
  %v184 = vpop.f32.mrf.mxu0
  %v185 = vadd.f32 %v85, %v184
  %v186 = vpop.f32.mrf.mxu0
  %v187 = vadd.f32 %v85, %v186
  %188 = vmatmul.bf16.gmra.mxu0 %v114
  %v189 = vpop.f32.mrf.mxu0
  %v190 = vadd.f32 %v85, %v189
  %v191 = vpop.f32.mrf.mxu0
  %v192 = vadd.f32 %v85, %v191
  %193 = vmatmul.bf16.gmra.mxu0 %v117
  %v194 = vpop.f32.mrf.mxu0
  %v195 = vadd.f32 %v85, %v194
  %v196 = vpop.f32.mrf.mxu0
  %v197 = vadd.f32 %v85, %v196
  %198 = vmatmul.bf16.gmra.mxu0 %v120
  %v199 = vpop.f32.mrf.mxu0
  %v200 = vadd.f32 %v85, %v199
  %v201 = vpop.f32.mrf.mxu0
  %v202 = vadd.f32 %v85, %v201
  %203 = vmatmul.bf16.gmra.mxu0 %v123
  %v204 = vpop.f32.mrf.mxu0
  %v205 = vadd.f32 %v85, %v204
  %v206 = vpop.f32.mrf.mxu0
  %v207 = vadd.f32 %v85, %v206
  %208 = vmatmul.bf16.gmra.mxu0 %v126
  %v209 = vpop.f32.mrf.mxu0
  %v210 = vadd.f32 %v85, %v209
  %v211 = vpop.f32.mrf.mxu0
  %v212 = vadd.f32 %v85, %v211
  %213 = vmatmul.bf16.gmra.mxu0 %v129
  %v214 = vpop.f32.mrf.mxu0
  %v215 = vadd.f32 %v85, %v214
  %v216 = vpop.f32.mrf.mxu0
  %v217 = vadd.f32 %v85, %v216
  %218 = vmatmul.bf16.gmra.mxu0 %v132
  %v219 = vpop.f32.mrf.mxu0
  %v220 = vadd.f32 %v85, %v219
  %v221 = vpop.f32.mrf.mxu0
  %v222 = vadd.f32 %v85, %v221
  %223 = vmatmul.bf16.gmra.mxu0 %v135
  %v224 = vpop.f32.mrf.mxu0
  %v225 = vadd.f32 %v85, %v224
  %v226 = vpop.f32.mrf.mxu0
  %v227 = vadd.f32 %v85, %v226
  %228 = vmatmul.bf16.gmra.mxu0 %v138
  %v229 = vpop.f32.mrf.mxu0
  %v230 = vadd.f32 %v85, %v229
  %v231 = vpop.f32.mrf.mxu0
  %v232 = vadd.f32 %v85, %v231
  %233 = vmatmul.bf16.gmra.mxu0 %v141
  %v234 = vpop.f32.mrf.mxu0
  %v235 = vadd.f32 %v85, %v234
  %v236 = vpop.f32.mrf.mxu0
  %v237 = vadd.f32 %v85, %v236
  %238 = vmatmul.bf16.gmra.mxu0 %v144
  %v239 = vpop.f32.mrf.mxu0
  %v240 = vadd.f32 %v85, %v239
  %v241 = vpop.f32.mrf.mxu0
  %v242 = vadd.f32 %v85, %v241
  %243 = vmatmul.bf16.gmra.mxu0 %v147
  %v244 = vpop.f32.mrf.mxu0
  %v245 = vadd.f32 %v85, %v244
  %v246 = vpop.f32.mrf.mxu0
  %v247 = vadd.f32 %v85, %v246
  %248 = vmatmul.bf16.gmra.mxu0 %v150
  %v249 = vpop.f32.mrf.mxu0
  %v250 = vadd.f32 %v85, %v249
  %v251 = vpop.f32.mrf.mxu0
  %v252 = vadd.f32 %v85, %v251
  %253 = vmatmul.bf16.gmra.mxu0 %v153
  %v254 = vpop.f32.mrf.mxu0
  %v255 = vadd.f32 %v85, %v254
  %v256 = vpop.f32.mrf.mxu0
  %v257 = vadd.f32 %v85, %v256
  %258 = vmatmul.bf16.gmra.mxu0 %v156
  %v259 = vpop.f32.mrf.mxu0
  %v260 = vadd.f32 %v85, %v259
  %v261 = vpop.f32.mrf.mxu0
  %v262 = vadd.f32 %v85, %v261
  %263 = vmatmul.bf16.gmra.mxu0 %v159
  %v264 = vpop.f32.mrf.mxu0
  %v265 = vadd.f32 %v85, %v264
  %v266 = vpop.f32.mrf.mxu0
  %v267 = vadd.f32 %v85, %v266
  %268 = vdwg.mxu0
  %v269 = vmul.f32 %v175, 0.01
  %v270 = vmul.f32 %v177, 0.01
  %v271 = vmul.f32 %v180, 0.01
  %v272 = vmul.f32 %v182, 0.01
  %v273 = vmul.f32 %v185, 0.01
  %v274 = vmul.f32 %v187, 0.01
  %v275 = vmul.f32 %v190, 0.01
  %v276 = vmul.f32 %v192, 0.01
  %v277 = vmul.f32 %v195, 0.01
  %v278 = vmul.f32 %v197, 0.01
  %v279 = vmul.f32 %v200, 0.01
  %v280 = vmul.f32 %v202, 0.01
  %v281 = vmul.f32 %v205, 0.01
  %v282 = vmul.f32 %v207, 0.01
  %v283 = vmul.f32 %v210, 0.01
  %v284 = vmul.f32 %v212, 0.01
  %v285 = vmul.f32 %v215, 0.01
  %v286 = vmul.f32 %v217, 0.01
  %v287 = vmul.f32 %v220, 0.01
  %v288 = vmul.f32 %v222, 0.01
  %v289 = vmul.f32 %v225, 0.01
  %v290 = vmul.f32 %v227, 0.01
  %v291 = vmul.f32 %v230, 0.01
  %v292 = vmul.f32 %v232, 0.01
  %v293 = vmul.f32 %v235, 0.01
  %v294 = vmul.f32 %v237, 0.01
  %v295 = vmul.f32 %v240, 0.01
  %v296 = vmul.f32 %v242, 0.01
  %v297 = vmul.f32 %v245, 0.01
  %v298 = vmul.f32 %v247, 0.01
  %v299 = vmul.f32 %v250, 0.01
  %v300 = vmul.f32 %v252, 0.01
  %v301 = vmul.f32 %v255, 0.01
  %v302 = vmul.f32 %v257, 0.01
  %v303 = vmul.f32 %v260, 0.01
  %v304 = vmul.f32 %v262, 0.01
  %v305 = vmul.f32 %v265, 0.01
  %v306 = vmul.f32 %v267, 0.01
  %v307 = vmax.f32 %v175, %v269
  %v308 = vmax.f32 %v177, %v270
  %v309 = vmax.f32 %v180, %v271
  %v310 = vmax.f32 %v182, %v272
  %v311 = vmax.f32 %v185, %v273
  %v312 = vmax.f32 %v187, %v274
  %v313 = vmax.f32 %v190, %v275
  %v314 = vmax.f32 %v192, %v276
  %v315 = vmax.f32 %v195, %v277
  %v316 = vmax.f32 %v197, %v278
  %v317 = vmax.f32 %v200, %v279
  %v318 = vmax.f32 %v202, %v280
  %v319 = vmax.f32 %v205, %v281
  %v320 = vmax.f32 %v207, %v282
  %v321 = vmax.f32 %v210, %v283
  %v322 = vmax.f32 %v212, %v284
  %v323 = vmax.f32 %v215, %v285
  %v324 = vmax.f32 %v217, %v286
  %v325 = vmax.f32 %v220, %v287
  %v326 = vmax.f32 %v222, %v288
  %v327 = vmax.f32 %v225, %v289
  %v328 = vmax.f32 %v227, %v290
  %v329 = vmax.f32 %v230, %v291
  %v330 = vmax.f32 %v232, %v292
  %v331 = vmax.f32 %v235, %v293
  %v332 = vmax.f32 %v237, %v294
  %v333 = vmax.f32 %v240, %v295
  %v334 = vmax.f32 %v242, %v296
  %v335 = vmax.f32 %v245, %v297
  %v336 = vmax.f32 %v247, %v298
  %v337 = vmax.f32 %v250, %v299
  %v338 = vmax.f32 %v252, %v300
  %v339 = vmax.f32 %v255, %v301
  %v340 = vmax.f32 %v257, %v302
  %v341 = vmax.f32 %v260, %v303
  %v342 = vmax.f32 %v262, %v304
  %v343 = vmax.f32 %v265, %v305
  %v344 = vmax.f32 %v267, %v306
  %v345 = vpack.c.bf16 %v308, %v307
  %v346 = vpack.c.bf16 %v310, %v309
  %v347 = vpack.c.bf16 %v312, %v311
  %v348 = vpack.c.bf16 %v314, %v313
  %v349 = vpack.c.bf16 %v316, %v315
  %v350 = vpack.c.bf16 %v318, %v317
  %v351 = vpack.c.bf16 %v320, %v319
  %v352 = vpack.c.bf16 %v322, %v321
  %v353 = vpack.c.bf16 %v324, %v323
  %v354 = vpack.c.bf16 %v326, %v325
  %v355 = vpack.c.bf16 %v328, %v327
  %v356 = vpack.c.bf16 %v330, %v329
  %v357 = vpack.c.bf16 %v332, %v331
  %v358 = vpack.c.bf16 %v334, %v333
  %v359 = vpack.c.bf16 %v336, %v335
  %v360 = vpack.c.bf16 %v338, %v337
  %v361 = vpack.c.bf16 %v340, %v339
  %v362 = vpack.c.bf16 %v342, %v341
  %v363 = vpack.c.bf16 %v344, %v343
  %v364 = vld [vmem:[%s2] sm:$0xf]
  %v365 = vld [vmem:[%s2 + $0x4] sm:$0xf]
  %v366 = vld [vmem:[%s2 + $0x8] sm:$0xf]
  %v367 = vld [vmem:[%s2 + $0xc] sm:$0xf]
  %v368 = vld [vmem:[%s2 + $0x10] sm:$0xf]
  %v369 = vld [vmem:[%s2 + $0x14] sm:$0xf]
  %v370 = vld [vmem:[%s2 + $0x18] sm:$0xf]
  %v371 = vld [vmem:[%s2 + $0x1c] sm:$0xf]
  %v372 = vld [vmem:[%s2 + $0x20] sm:$0xf]
  %v373 = vld [vmem:[%s2 + $0x24] sm:$0xf]
  %v374 = vld [vmem:[%s2 + $0x28] sm:$0xf]
  %v375 = vld [vmem:[%s2 + $0x2c] sm:$0xf]
  %v376 = vld [vmem:[%s2 + $0x30] sm:$0xf]
  %v377 = vld [vmem:[%s2 + $0x34] sm:$0xf]
  %v378 = vld [vmem:[%s2 + $0x38] sm:$0xf]
  %v379 = vld [vmem:[%s2 + $0x3c] sm:$0xf]
  %v380 = vperm.slane %v21, 1
  %v397 = vunpack.c.l.b16 %v364
  %v398 = vunpack.c.l.b16 %v365
  %v399 = vunpack.c.l.b16 %v366
  %v400 = vunpack.c.l.b16 %v367
  %v401 = vunpack.c.l.b16 %v368
  %v402 = vunpack.c.l.b16 %v369
  %v403 = vunpack.c.l.b16 %v370
  %v404 = vunpack.c.l.b16 %v371
  %v405 = vunpack.c.l.b16 %v372
  %v406 = vunpack.c.l.b16 %v373
  %v407 = vunpack.c.l.b16 %v374
  %v408 = vunpack.c.l.b16 %v375
  %v409 = vunpack.c.l.b16 %v376
  %v410 = vunpack.c.l.b16 %v377
  %v411 = vunpack.c.l.b16 %v378
  %v412 = vunpack.c.l.b16 %v379
  %v413 = vpack.c.b16 %v398, %v397
  %v414 = vpack.c.b16 %v400, %v399
  %v415 = vpack.c.b16 %v402, %v401
  %v416 = vpack.c.b16 %v404, %v403
  %v417 = vpack.c.b16 %v406, %v405
  %v418 = vpack.c.b16 %v408, %v407
  %v419 = vpack.c.b16 %v410, %v409
  %v420 = vpack.c.b16 %v412, %v411
  %429 = vmatpush.bf16.msra.mxu0 %v420
  %430 = vmatpush.bf16.msra.mxu0 %v419
  %431 = vmatpush.bf16.msra.mxu0 %v418
  %432 = vmatpush.bf16.msra.mxu0 %v417
  %433 = vmatpush.bf16.msra.mxu0 %v416
  %434 = vmatpush.bf16.msra.mxu0 %v415
  %435 = vmatpush.bf16.msra.mxu0 %v414
  %436 = vmatpush.bf16.msra.mxu0 %v413
  %437 = vmatmul.bf16.gmra.mxu0 %v345
  %v438 = vpop.f32.mrf.mxu0
  %v439 = vadd.f32 %v380, %v438
  %v440 = vpop.f32.mrf.mxu0
  %v441 = vadd.f32 %v380, %v440
  %442 = vmatmul.bf16.gmra.mxu0 %v346
  %v443 = vpop.f32.mrf.mxu0
  %v444 = vadd.f32 %v380, %v443
  %v445 = vpop.f32.mrf.mxu0
  %v446 = vadd.f32 %v380, %v445
  %447 = vmatmul.bf16.gmra.mxu0 %v347
  %v448 = vpop.f32.mrf.mxu0
  %v449 = vadd.f32 %v380, %v448
  %v450 = vpop.f32.mrf.mxu0
  %v451 = vadd.f32 %v380, %v450
  %452 = vmatmul.bf16.gmra.mxu0 %v348
  %v453 = vpop.f32.mrf.mxu0
  %v454 = vadd.f32 %v380, %v453
  %v455 = vpop.f32.mrf.mxu0
  %v456 = vadd.f32 %v380, %v455
  %457 = vmatmul.bf16.gmra.mxu0 %v349
  %v458 = vpop.f32.mrf.mxu0
  %v459 = vadd.f32 %v380, %v458
  %v460 = vpop.f32.mrf.mxu0
  %v461 = vadd.f32 %v380, %v460
  %462 = vmatmul.bf16.gmra.mxu0 %v350
  %v463 = vpop.f32.mrf.mxu0
  %v464 = vadd.f32 %v380, %v463
  %v465 = vpop.f32.mrf.mxu0
  %v466 = vadd.f32 %v380, %v465
  %467 = vmatmul.bf16.gmra.mxu0 %v351
  %v468 = vpop.f32.mrf.mxu0
  %v469 = vadd.f32 %v380, %v468
  %v470 = vpop.f32.mrf.mxu0
  %v471 = vadd.f32 %v380, %v470
  %472 = vmatmul.bf16.gmra.mxu0 %v352
  %v473 = vpop.f32.mrf.mxu0
  %v474 = vadd.f32 %v380, %v473
  %v475 = vpop.f32.mrf.mxu0
  %v476 = vadd.f32 %v380, %v475
  %477 = vmatmul.bf16.gmra.mxu0 %v353
  %v478 = vpop.f32.mrf.mxu0
  %v479 = vadd.f32 %v380, %v478
  %v480 = vpop.f32.mrf.mxu0
  %v481 = vadd.f32 %v380, %v480
  %482 = vmatmul.bf16.gmra.mxu0 %v354
  %v483 = vpop.f32.mrf.mxu0
  %v484 = vadd.f32 %v380, %v483
  %v485 = vpop.f32.mrf.mxu0
  %v486 = vadd.f32 %v380, %v485
  %487 = vmatmul.bf16.gmra.mxu0 %v355
  %v488 = vpop.f32.mrf.mxu0
  %v489 = vadd.f32 %v380, %v488
  %v490 = vpop.f32.mrf.mxu0
  %v491 = vadd.f32 %v380, %v490
  %492 = vmatmul.bf16.gmra.mxu0 %v356
  %v493 = vpop.f32.mrf.mxu0
  %v494 = vadd.f32 %v380, %v493
  %v495 = vpop.f32.mrf.mxu0
  %v496 = vadd.f32 %v380, %v495
  %497 = vmatmul.bf16.gmra.mxu0 %v357
  %v498 = vpop.f32.mrf.mxu0
  %v499 = vadd.f32 %v380, %v498
  %v500 = vpop.f32.mrf.mxu0
  %v501 = vadd.f32 %v380, %v500
  %502 = vmatmul.bf16.gmra.mxu0 %v358
  %v503 = vpop.f32.mrf.mxu0
  %v504 = vadd.f32 %v380, %v503
  %v505 = vpop.f32.mrf.mxu0
  %v506 = vadd.f32 %v380, %v505
  %507 = vmatmul.bf16.gmra.mxu0 %v359
  %v508 = vpop.f32.mrf.mxu0
  %v509 = vadd.f32 %v380, %v508
  %v510 = vpop.f32.mrf.mxu0
  %v511 = vadd.f32 %v380, %v510
  %512 = vmatmul.bf16.gmra.mxu0 %v360
  %v513 = vpop.f32.mrf.mxu0
  %v514 = vadd.f32 %v380, %v513
  %v515 = vpop.f32.mrf.mxu0
  %v516 = vadd.f32 %v380, %v515
  %517 = vmatmul.bf16.gmra.mxu0 %v361
  %v518 = vpop.f32.mrf.mxu0
  %v519 = vadd.f32 %v380, %v518
  %v520 = vpop.f32.mrf.mxu0
  %v521 = vadd.f32 %v380, %v520
  %522 = vmatmul.bf16.gmra.mxu0 %v362
  %v523 = vpop.f32.mrf.mxu0
  %v524 = vadd.f32 %v380, %v523
  %v525 = vpop.f32.mrf.mxu0
  %v526 = vadd.f32 %v380, %v525
  %527 = vmatmul.bf16.gmra.mxu0 %v363
  %v528 = vpop.f32.mrf.mxu0
  %v529 = vadd.f32 %v380, %v528
  %v530 = vpop.f32.mrf.mxu0
  %v531 = vadd.f32 %v380, %v530
  %532 = vdwg.mxu0
  %v533 = vmul.f32 %v439, 0.01
  %v534 = vmul.f32 %v441, 0.01
  %v535 = vmul.f32 %v444, 0.01
  %v536 = vmul.f32 %v446, 0.01
  %v537 = vmul.f32 %v449, 0.01
  %v538 = vmul.f32 %v451, 0.01
  %v539 = vmul.f32 %v454, 0.01
  %v540 = vmul.f32 %v456, 0.01
  %v541 = vmul.f32 %v459, 0.01
  %v542 = vmul.f32 %v461, 0.01
  %v543 = vmul.f32 %v464, 0.01
  %v544 = vmul.f32 %v466, 0.01
  %v545 = vmul.f32 %v469, 0.01
  %v546 = vmul.f32 %v471, 0.01
  %v547 = vmul.f32 %v474, 0.01
  %v548 = vmul.f32 %v476, 0.01
  %v549 = vmul.f32 %v479, 0.01
  %v550 = vmul.f32 %v481, 0.01
  %v551 = vmul.f32 %v484, 0.01
  %v552 = vmul.f32 %v486, 0.01
  %v553 = vmul.f32 %v489, 0.01
  %v554 = vmul.f32 %v491, 0.01
  %v555 = vmul.f32 %v494, 0.01
  %v556 = vmul.f32 %v496, 0.01
  %v557 = vmul.f32 %v499, 0.01
  %v558 = vmul.f32 %v501, 0.01
  %v559 = vmul.f32 %v504, 0.01
  %v560 = vmul.f32 %v506, 0.01
  %v561 = vmul.f32 %v509, 0.01
  %v562 = vmul.f32 %v511, 0.01
  %v563 = vmul.f32 %v514, 0.01
  %v564 = vmul.f32 %v516, 0.01
  %v565 = vmul.f32 %v519, 0.01
  %v566 = vmul.f32 %v521, 0.01
  %v567 = vmul.f32 %v524, 0.01
  %v568 = vmul.f32 %v526, 0.01
  %v569 = vmul.f32 %v529, 0.01
  %v570 = vmul.f32 %v531, 0.01
  %v571 = vmax.f32 %v439, %v533
  %v572 = vmax.f32 %v441, %v534
  %v573 = vmax.f32 %v444, %v535
  %v574 = vmax.f32 %v446, %v536
  %v575 = vmax.f32 %v449, %v537
  %v576 = vmax.f32 %v451, %v538
  %v577 = vmax.f32 %v454, %v539
  %v578 = vmax.f32 %v456, %v540
  %v579 = vmax.f32 %v459, %v541
  %v580 = vmax.f32 %v461, %v542
  %v581 = vmax.f32 %v464, %v543
  %v582 = vmax.f32 %v466, %v544
  %v583 = vmax.f32 %v469, %v545
  %v584 = vmax.f32 %v471, %v546
  %v585 = vmax.f32 %v474, %v547
  %v586 = vmax.f32 %v476, %v548
  %v587 = vmax.f32 %v479, %v549
  %v588 = vmax.f32 %v481, %v550
  %v589 = vmax.f32 %v484, %v551
  %v590 = vmax.f32 %v486, %v552
  %v591 = vmax.f32 %v489, %v553
  %v592 = vmax.f32 %v491, %v554
  %v593 = vmax.f32 %v494, %v555
  %v594 = vmax.f32 %v496, %v556
  %v595 = vmax.f32 %v499, %v557
  %v596 = vmax.f32 %v501, %v558
  %v597 = vmax.f32 %v504, %v559
  %v598 = vmax.f32 %v506, %v560
  %v599 = vmax.f32 %v509, %v561
  %v600 = vmax.f32 %v511, %v562
  %v601 = vmax.f32 %v514, %v563
  %v602 = vmax.f32 %v516, %v564
  %v603 = vmax.f32 %v519, %v565
  %v604 = vmax.f32 %v521, %v566
  %v605 = vmax.f32 %v524, %v567
  %v606 = vmax.f32 %v526, %v568
  %v607 = vmax.f32 %v529, %v569
  %v608 = vmax.f32 %v531, %v570
  %v609 = vpack.c.bf16 %v572, %v571
  %v610 = vpack.c.bf16 %v574, %v573
  %v611 = vpack.c.bf16 %v576, %v575
  %v612 = vpack.c.bf16 %v578, %v577
  %v613 = vpack.c.bf16 %v580, %v579
  %v614 = vpack.c.bf16 %v582, %v581
  %v615 = vpack.c.bf16 %v584, %v583
  %v616 = vpack.c.bf16 %v586, %v585
  %v617 = vpack.c.bf16 %v588, %v587
  %v618 = vpack.c.bf16 %v590, %v589
  %v619 = vpack.c.bf16 %v592, %v591
  %v620 = vpack.c.bf16 %v594, %v593
  %v621 = vpack.c.bf16 %v596, %v595
  %v622 = vpack.c.bf16 %v598, %v597
  %v623 = vpack.c.bf16 %v600, %v599
  %v624 = vpack.c.bf16 %v602, %v601
  %v625 = vpack.c.bf16 %v604, %v603
  %v626 = vpack.c.bf16 %v606, %v605
  %v627 = vpack.c.bf16 %v608, %v607
  %s628 = scalar_lea.vmem %s2, 64
  %v629 = vld [vmem:[%s628] sm:$0xf]
  %v630 = vld [vmem:[%s628 + $0x4] sm:$0xf]
  %v631 = vld [vmem:[%s628 + $0x8] sm:$0xf]
  %v632 = vld [vmem:[%s628 + $0xc] sm:$0xf]
  %v633 = vld [vmem:[%s628 + $0x10] sm:$0xf]
  %v634 = vld [vmem:[%s628 + $0x14] sm:$0xf]
  %v635 = vld [vmem:[%s628 + $0x18] sm:$0xf]
  %v636 = vld [vmem:[%s628 + $0x1c] sm:$0xf]
  %v637 = vld [vmem:[%s628 + $0x20] sm:$0xf]
  %v638 = vld [vmem:[%s628 + $0x24] sm:$0xf]
  %v639 = vld [vmem:[%s628 + $0x28] sm:$0xf]
  %v640 = vld [vmem:[%s628 + $0x2c] sm:$0xf]
  %v641 = vld [vmem:[%s628 + $0x30] sm:$0xf]
  %v642 = vld [vmem:[%s628 + $0x34] sm:$0xf]
  %v643 = vld [vmem:[%s628 + $0x38] sm:$0xf]
  %v644 = vld [vmem:[%s628 + $0x3c] sm:$0xf]
  %v645 = vperm.slane %v21, 2
  %v662 = vunpack.c.l.b16 %v629
  %v663 = vunpack.c.l.b16 %v630
  %v664 = vunpack.c.l.b16 %v631
  %v665 = vunpack.c.l.b16 %v632
  %v666 = vunpack.c.l.b16 %v633
  %v667 = vunpack.c.l.b16 %v634
  %v668 = vunpack.c.l.b16 %v635
  %v669 = vunpack.c.l.b16 %v636
  %v670 = vunpack.c.l.b16 %v637
  %v671 = vunpack.c.l.b16 %v638
  %v672 = vunpack.c.l.b16 %v639
  %v673 = vunpack.c.l.b16 %v640
  %v674 = vunpack.c.l.b16 %v641
  %v675 = vunpack.c.l.b16 %v642
  %v676 = vunpack.c.l.b16 %v643
  %v677 = vunpack.c.l.b16 %v644
  %v678 = vpack.c.b16 %v663, %v662
  %v679 = vpack.c.b16 %v665, %v664
  %v680 = vpack.c.b16 %v667, %v666
  %v681 = vpack.c.b16 %v669, %v668
  %v682 = vpack.c.b16 %v671, %v670
  %v683 = vpack.c.b16 %v673, %v672
  %v684 = vpack.c.b16 %v675, %v674
  %v685 = vpack.c.b16 %v677, %v676
  %694 = vmatpush.bf16.msra.mxu0 %v685
  %695 = vmatpush.bf16.msra.mxu0 %v684
  %696 = vmatpush.bf16.msra.mxu0 %v683
  %697 = vmatpush.bf16.msra.mxu0 %v682
  %698 = vmatpush.bf16.msra.mxu0 %v681
  %699 = vmatpush.bf16.msra.mxu0 %v680
  %700 = vmatpush.bf16.msra.mxu0 %v679
  %701 = vmatpush.bf16.msra.mxu0 %v678
  %702 = vmatmul.bf16.gmra.mxu0 %v609
  %v703 = vpop.f32.mrf.mxu0
  %v704 = vadd.f32 %v645, %v703
  %v705 = vpop.f32.mrf.mxu0
  %v706 = vadd.f32 %v645, %v705
  %707 = vmatmul.bf16.gmra.mxu0 %v610
  %v708 = vpop.f32.mrf.mxu0
  %v709 = vadd.f32 %v645, %v708
  %v710 = vpop.f32.mrf.mxu0
  %v711 = vadd.f32 %v645, %v710
  %712 = vmatmul.bf16.gmra.mxu0 %v611
  %v713 = vpop.f32.mrf.mxu0
  %v714 = vadd.f32 %v645, %v713
  %v715 = vpop.f32.mrf.mxu0
  %v716 = vadd.f32 %v645, %v715
  %717 = vmatmul.bf16.gmra.mxu0 %v612
  %v718 = vpop.f32.mrf.mxu0
  %v719 = vadd.f32 %v645, %v718
  %v720 = vpop.f32.mrf.mxu0
  %v721 = vadd.f32 %v645, %v720
  %722 = vmatmul.bf16.gmra.mxu0 %v613
  %v723 = vpop.f32.mrf.mxu0
  %v724 = vadd.f32 %v645, %v723
  %v725 = vpop.f32.mrf.mxu0
  %v726 = vadd.f32 %v645, %v725
  %727 = vmatmul.bf16.gmra.mxu0 %v614
  %v728 = vpop.f32.mrf.mxu0
  %v729 = vadd.f32 %v645, %v728
  %v730 = vpop.f32.mrf.mxu0
  %v731 = vadd.f32 %v645, %v730
  %732 = vmatmul.bf16.gmra.mxu0 %v615
  %v733 = vpop.f32.mrf.mxu0
  %v734 = vadd.f32 %v645, %v733
  %v735 = vpop.f32.mrf.mxu0
  %v736 = vadd.f32 %v645, %v735
  %737 = vmatmul.bf16.gmra.mxu0 %v616
  %v738 = vpop.f32.mrf.mxu0
  %v739 = vadd.f32 %v645, %v738
  %v740 = vpop.f32.mrf.mxu0
  %v741 = vadd.f32 %v645, %v740
  %742 = vmatmul.bf16.gmra.mxu0 %v617
  %v743 = vpop.f32.mrf.mxu0
  %v744 = vadd.f32 %v645, %v743
  %v745 = vpop.f32.mrf.mxu0
  %v746 = vadd.f32 %v645, %v745
  %747 = vmatmul.bf16.gmra.mxu0 %v618
  %v748 = vpop.f32.mrf.mxu0
  %v749 = vadd.f32 %v645, %v748
  %v750 = vpop.f32.mrf.mxu0
  %v751 = vadd.f32 %v645, %v750
  %752 = vmatmul.bf16.gmra.mxu0 %v619
  %v753 = vpop.f32.mrf.mxu0
  %v754 = vadd.f32 %v645, %v753
  %v755 = vpop.f32.mrf.mxu0
  %v756 = vadd.f32 %v645, %v755
  %757 = vmatmul.bf16.gmra.mxu0 %v620
  %v758 = vpop.f32.mrf.mxu0
  %v759 = vadd.f32 %v645, %v758
  %v760 = vpop.f32.mrf.mxu0
  %v761 = vadd.f32 %v645, %v760
  %762 = vmatmul.bf16.gmra.mxu0 %v621
  %v763 = vpop.f32.mrf.mxu0
  %v764 = vadd.f32 %v645, %v763
  %v765 = vpop.f32.mrf.mxu0
  %v766 = vadd.f32 %v645, %v765
  %767 = vmatmul.bf16.gmra.mxu0 %v622
  %v768 = vpop.f32.mrf.mxu0
  %v769 = vadd.f32 %v645, %v768
  %v770 = vpop.f32.mrf.mxu0
  %v771 = vadd.f32 %v645, %v770
  %772 = vmatmul.bf16.gmra.mxu0 %v623
  %v773 = vpop.f32.mrf.mxu0
  %v774 = vadd.f32 %v645, %v773
  %v775 = vpop.f32.mrf.mxu0
  %v776 = vadd.f32 %v645, %v775
  %777 = vmatmul.bf16.gmra.mxu0 %v624
  %v778 = vpop.f32.mrf.mxu0
  %v779 = vadd.f32 %v645, %v778
  %v780 = vpop.f32.mrf.mxu0
  %v781 = vadd.f32 %v645, %v780
  %782 = vmatmul.bf16.gmra.mxu0 %v625
  %v783 = vpop.f32.mrf.mxu0
  %v784 = vadd.f32 %v645, %v783
  %v785 = vpop.f32.mrf.mxu0
  %v786 = vadd.f32 %v645, %v785
  %787 = vmatmul.bf16.gmra.mxu0 %v626
  %v788 = vpop.f32.mrf.mxu0
  %v789 = vadd.f32 %v645, %v788
  %v790 = vpop.f32.mrf.mxu0
  %v791 = vadd.f32 %v645, %v790
  %792 = vmatmul.bf16.gmra.mxu0 %v627
  %v793 = vpop.f32.mrf.mxu0
  %v794 = vadd.f32 %v645, %v793
  %v795 = vpop.f32.mrf.mxu0
  %v796 = vadd.f32 %v645, %v795
  %797 = vdwg.mxu0
  %v798 = vmul.f32 %v704, 0.01
  %v799 = vmul.f32 %v706, 0.01
  %v800 = vmul.f32 %v709, 0.01
  %v801 = vmul.f32 %v711, 0.01
  %v802 = vmul.f32 %v714, 0.01
  %v803 = vmul.f32 %v716, 0.01
  %v804 = vmul.f32 %v719, 0.01
  %v805 = vmul.f32 %v721, 0.01
  %v806 = vmul.f32 %v724, 0.01
  %v807 = vmul.f32 %v726, 0.01
  %v808 = vmul.f32 %v729, 0.01
  %v809 = vmul.f32 %v731, 0.01
  %v810 = vmul.f32 %v734, 0.01
  %v811 = vmul.f32 %v736, 0.01
  %v812 = vmul.f32 %v739, 0.01
  %v813 = vmul.f32 %v741, 0.01
  %v814 = vmul.f32 %v744, 0.01
  %v815 = vmul.f32 %v746, 0.01
  %v816 = vmul.f32 %v749, 0.01
  %v817 = vmul.f32 %v751, 0.01
  %v818 = vmul.f32 %v754, 0.01
  %v819 = vmul.f32 %v756, 0.01
  %v820 = vmul.f32 %v759, 0.01
  %v821 = vmul.f32 %v761, 0.01
  %v822 = vmul.f32 %v764, 0.01
  %v823 = vmul.f32 %v766, 0.01
  %v824 = vmul.f32 %v769, 0.01
  %v825 = vmul.f32 %v771, 0.01
  %v826 = vmul.f32 %v774, 0.01
  %v827 = vmul.f32 %v776, 0.01
  %v828 = vmul.f32 %v779, 0.01
  %v829 = vmul.f32 %v781, 0.01
  %v830 = vmul.f32 %v784, 0.01
  %v831 = vmul.f32 %v786, 0.01
  %v832 = vmul.f32 %v789, 0.01
  %v833 = vmul.f32 %v791, 0.01
  %v834 = vmul.f32 %v794, 0.01
  %v835 = vmul.f32 %v796, 0.01
  %v836 = vmax.f32 %v704, %v798
  %v837 = vmax.f32 %v706, %v799
  %v838 = vmax.f32 %v709, %v800
  %v839 = vmax.f32 %v711, %v801
  %v840 = vmax.f32 %v714, %v802
  %v841 = vmax.f32 %v716, %v803
  %v842 = vmax.f32 %v719, %v804
  %v843 = vmax.f32 %v721, %v805
  %v844 = vmax.f32 %v724, %v806
  %v845 = vmax.f32 %v726, %v807
  %v846 = vmax.f32 %v729, %v808
  %v847 = vmax.f32 %v731, %v809
  %v848 = vmax.f32 %v734, %v810
  %v849 = vmax.f32 %v736, %v811
  %v850 = vmax.f32 %v739, %v812
  %v851 = vmax.f32 %v741, %v813
  %v852 = vmax.f32 %v744, %v814
  %v853 = vmax.f32 %v746, %v815
  %v854 = vmax.f32 %v749, %v816
  %v855 = vmax.f32 %v751, %v817
  %v856 = vmax.f32 %v754, %v818
  %v857 = vmax.f32 %v756, %v819
  %v858 = vmax.f32 %v759, %v820
  %v859 = vmax.f32 %v761, %v821
  %v860 = vmax.f32 %v764, %v822
  %v861 = vmax.f32 %v766, %v823
  %v862 = vmax.f32 %v769, %v824
  %v863 = vmax.f32 %v771, %v825
  %v864 = vmax.f32 %v774, %v826
  %v865 = vmax.f32 %v776, %v827
  %v866 = vmax.f32 %v779, %v828
  %v867 = vmax.f32 %v781, %v829
  %v868 = vmax.f32 %v784, %v830
  %v869 = vmax.f32 %v786, %v831
  %v870 = vmax.f32 %v789, %v832
  %v871 = vmax.f32 %v791, %v833
  %v872 = vmax.f32 %v794, %v834
  %v873 = vmax.f32 %v796, %v835
  %v874 = vpack.c.bf16 %v837, %v836
  %v875 = vpack.c.bf16 %v839, %v838
  %v876 = vpack.c.bf16 %v841, %v840
  %v877 = vpack.c.bf16 %v843, %v842
  %v878 = vpack.c.bf16 %v845, %v844
  %v879 = vpack.c.bf16 %v847, %v846
  %v880 = vpack.c.bf16 %v849, %v848
  %v881 = vpack.c.bf16 %v851, %v850
  %v882 = vpack.c.bf16 %v853, %v852
  %v883 = vpack.c.bf16 %v855, %v854
  %v884 = vpack.c.bf16 %v857, %v856
  %v885 = vpack.c.bf16 %v859, %v858
  %v886 = vpack.c.bf16 %v861, %v860
  %v887 = vpack.c.bf16 %v863, %v862
  %v888 = vpack.c.bf16 %v865, %v864
  %v889 = vpack.c.bf16 %v867, %v866
  %v890 = vpack.c.bf16 %v869, %v868
  %v891 = vpack.c.bf16 %v871, %v870
  %v892 = vpack.c.bf16 %v873, %v872
  %s893 = scalar_lea.vmem %s2, 128
  %v894 = vld [vmem:[%s893] sm:$0xf]
  %v895 = vld [vmem:[%s893 + $0x4] sm:$0xf]
  %v896 = vld [vmem:[%s893 + $0x8] sm:$0xf]
  %v897 = vld [vmem:[%s893 + $0xc] sm:$0xf]
  %v898 = vld [vmem:[%s893 + $0x10] sm:$0xf]
  %v899 = vld [vmem:[%s893 + $0x14] sm:$0xf]
  %v900 = vld [vmem:[%s893 + $0x18] sm:$0xf]
  %v901 = vld [vmem:[%s893 + $0x1c] sm:$0xf]
  %v902 = vld [vmem:[%s893 + $0x20] sm:$0xf]
  %v903 = vld [vmem:[%s893 + $0x24] sm:$0xf]
  %v904 = vld [vmem:[%s893 + $0x28] sm:$0xf]
  %v905 = vld [vmem:[%s893 + $0x2c] sm:$0xf]
  %v906 = vld [vmem:[%s893 + $0x30] sm:$0xf]
  %v907 = vld [vmem:[%s893 + $0x34] sm:$0xf]
  %v908 = vld [vmem:[%s893 + $0x38] sm:$0xf]
  %v909 = vld [vmem:[%s893 + $0x3c] sm:$0xf]
  %v910 = vperm.slane %v21, 3
  %v927 = vunpack.c.l.b16 %v894
  %v928 = vunpack.c.l.b16 %v895
  %v929 = vunpack.c.l.b16 %v896
  %v930 = vunpack.c.l.b16 %v897
  %v931 = vunpack.c.l.b16 %v898
  %v932 = vunpack.c.l.b16 %v899
  %v933 = vunpack.c.l.b16 %v900
  %v934 = vunpack.c.l.b16 %v901
  %v935 = vunpack.c.l.b16 %v902
  %v936 = vunpack.c.l.b16 %v903
  %v937 = vunpack.c.l.b16 %v904
  %v938 = vunpack.c.l.b16 %v905
  %v939 = vunpack.c.l.b16 %v906
  %v940 = vunpack.c.l.b16 %v907
  %v941 = vunpack.c.l.b16 %v908
  %v942 = vunpack.c.l.b16 %v909
  %v943 = vpack.c.b16 %v928, %v927
  %v944 = vpack.c.b16 %v930, %v929
  %v945 = vpack.c.b16 %v932, %v931
  %v946 = vpack.c.b16 %v934, %v933
  %v947 = vpack.c.b16 %v936, %v935
  %v948 = vpack.c.b16 %v938, %v937
  %v949 = vpack.c.b16 %v940, %v939
  %v950 = vpack.c.b16 %v942, %v941
  %959 = vmatpush.bf16.msra.mxu0 %v950
  %960 = vmatpush.bf16.msra.mxu0 %v949
  %961 = vmatpush.bf16.msra.mxu0 %v948
  %962 = vmatpush.bf16.msra.mxu0 %v947
  %963 = vmatpush.bf16.msra.mxu0 %v946
  %964 = vmatpush.bf16.msra.mxu0 %v945
  %965 = vmatpush.bf16.msra.mxu0 %v944
  %966 = vmatpush.bf16.msra.mxu0 %v943
  %967 = vmatmul.bf16.gmra.mxu0 %v874
  %v968 = vpop.f32.mrf.mxu0
  %v969 = vadd.f32 %v910, %v968
  %v970 = vpop.f32.mrf.mxu0
  %v971 = vadd.f32 %v910, %v970
  %972 = vmatmul.bf16.gmra.mxu0 %v875
  %v973 = vpop.f32.mrf.mxu0
  %v974 = vadd.f32 %v910, %v973
  %v975 = vpop.f32.mrf.mxu0
  %v976 = vadd.f32 %v910, %v975
  %977 = vmatmul.bf16.gmra.mxu0 %v876
  %v978 = vpop.f32.mrf.mxu0
  %v979 = vadd.f32 %v910, %v978
  %v980 = vpop.f32.mrf.mxu0
  %v981 = vadd.f32 %v910, %v980
  %982 = vmatmul.bf16.gmra.mxu0 %v877
  %v983 = vpop.f32.mrf.mxu0
  %v984 = vadd.f32 %v910, %v983
  %v985 = vpop.f32.mrf.mxu0
  %v986 = vadd.f32 %v910, %v985
  %987 = vmatmul.bf16.gmra.mxu0 %v878
  %v988 = vpop.f32.mrf.mxu0
  %v989 = vadd.f32 %v910, %v988
  %v990 = vpop.f32.mrf.mxu0
  %v991 = vadd.f32 %v910, %v990
  %992 = vmatmul.bf16.gmra.mxu0 %v879
  %v993 = vpop.f32.mrf.mxu0
  %v994 = vadd.f32 %v910, %v993
  %v995 = vpop.f32.mrf.mxu0
  %v996 = vadd.f32 %v910, %v995
  %997 = vmatmul.bf16.gmra.mxu0 %v880
  %v998 = vpop.f32.mrf.mxu0
  %v999 = vadd.f32 %v910, %v998
  %v1000 = vpop.f32.mrf.mxu0
  %v1001 = vadd.f32 %v910, %v1000
  %1002 = vmatmul.bf16.gmra.mxu0 %v881
  %v1003 = vpop.f32.mrf.mxu0
  %v1004 = vadd.f32 %v910, %v1003
  %v1005 = vpop.f32.mrf.mxu0
  %v1006 = vadd.f32 %v910, %v1005
  %1007 = vmatmul.bf16.gmra.mxu0 %v882
  %v1008 = vpop.f32.mrf.mxu0
  %v1009 = vadd.f32 %v910, %v1008
  %v1010 = vpop.f32.mrf.mxu0
  %v1011 = vadd.f32 %v910, %v1010
  %1012 = vmatmul.bf16.gmra.mxu0 %v883
  %v1013 = vpop.f32.mrf.mxu0
  %v1014 = vadd.f32 %v910, %v1013
  %v1015 = vpop.f32.mrf.mxu0
  %v1016 = vadd.f32 %v910, %v1015
  %1017 = vmatmul.bf16.gmra.mxu0 %v884
  %v1018 = vpop.f32.mrf.mxu0
  %v1019 = vadd.f32 %v910, %v1018
  %v1020 = vpop.f32.mrf.mxu0
  %v1021 = vadd.f32 %v910, %v1020
  %1022 = vmatmul.bf16.gmra.mxu0 %v885
  %v1023 = vpop.f32.mrf.mxu0
  %v1024 = vadd.f32 %v910, %v1023
  %v1025 = vpop.f32.mrf.mxu0
  %v1026 = vadd.f32 %v910, %v1025
  %1027 = vmatmul.bf16.gmra.mxu0 %v886
  %v1028 = vpop.f32.mrf.mxu0
  %v1029 = vadd.f32 %v910, %v1028
  %v1030 = vpop.f32.mrf.mxu0
  %v1031 = vadd.f32 %v910, %v1030
  %1032 = vmatmul.bf16.gmra.mxu0 %v887
  %v1033 = vpop.f32.mrf.mxu0
  %v1034 = vadd.f32 %v910, %v1033
  %v1035 = vpop.f32.mrf.mxu0
  %v1036 = vadd.f32 %v910, %v1035
  %1037 = vmatmul.bf16.gmra.mxu0 %v888
  %v1038 = vpop.f32.mrf.mxu0
  %v1039 = vadd.f32 %v910, %v1038
  %v1040 = vpop.f32.mrf.mxu0
  %v1041 = vadd.f32 %v910, %v1040
  %1042 = vmatmul.bf16.gmra.mxu0 %v889
  %v1043 = vpop.f32.mrf.mxu0
  %v1044 = vadd.f32 %v910, %v1043
  %v1045 = vpop.f32.mrf.mxu0
  %v1046 = vadd.f32 %v910, %v1045
  %1047 = vmatmul.bf16.gmra.mxu0 %v890
  %v1048 = vpop.f32.mrf.mxu0
  %v1049 = vadd.f32 %v910, %v1048
  %v1050 = vpop.f32.mrf.mxu0
  %v1051 = vadd.f32 %v910, %v1050
  %1052 = vmatmul.bf16.gmra.mxu0 %v891
  %v1053 = vpop.f32.mrf.mxu0
  %v1054 = vadd.f32 %v910, %v1053
  %v1055 = vpop.f32.mrf.mxu0
  %v1056 = vadd.f32 %v910, %v1055
  %1057 = vmatmul.bf16.gmra.mxu0 %v892
  %v1058 = vpop.f32.mrf.mxu0
  %v1059 = vadd.f32 %v910, %v1058
  %v1060 = vpop.f32.mrf.mxu0
  %v1061 = vadd.f32 %v910, %v1060
  %1062 = vdwg.mxu0
  %v1063 = vmul.f32 %v969, 0.01
  %v1064 = vmul.f32 %v971, 0.01
  %v1065 = vmul.f32 %v974, 0.01
  %v1066 = vmul.f32 %v976, 0.01
  %v1067 = vmul.f32 %v979, 0.01
  %v1068 = vmul.f32 %v981, 0.01
  %v1069 = vmul.f32 %v984, 0.01
  %v1070 = vmul.f32 %v986, 0.01
  %v1071 = vmul.f32 %v989, 0.01
  %v1072 = vmul.f32 %v991, 0.01
  %v1073 = vmul.f32 %v994, 0.01
  %v1074 = vmul.f32 %v996, 0.01
  %v1075 = vmul.f32 %v999, 0.01
  %v1076 = vmul.f32 %v1001, 0.01
  %v1077 = vmul.f32 %v1004, 0.01
  %v1078 = vmul.f32 %v1006, 0.01
  %v1079 = vmul.f32 %v1009, 0.01
  %v1080 = vmul.f32 %v1011, 0.01
  %v1081 = vmul.f32 %v1014, 0.01
  %v1082 = vmul.f32 %v1016, 0.01
  %v1083 = vmul.f32 %v1019, 0.01
  %v1084 = vmul.f32 %v1021, 0.01
  %v1085 = vmul.f32 %v1024, 0.01
  %v1086 = vmul.f32 %v1026, 0.01
  %v1087 = vmul.f32 %v1029, 0.01
  %v1088 = vmul.f32 %v1031, 0.01
  %v1089 = vmul.f32 %v1034, 0.01
  %v1090 = vmul.f32 %v1036, 0.01
  %v1091 = vmul.f32 %v1039, 0.01
  %v1092 = vmul.f32 %v1041, 0.01
  %v1093 = vmul.f32 %v1044, 0.01
  %v1094 = vmul.f32 %v1046, 0.01
  %v1095 = vmul.f32 %v1049, 0.01
  %v1096 = vmul.f32 %v1051, 0.01
  %v1097 = vmul.f32 %v1054, 0.01
  %v1098 = vmul.f32 %v1056, 0.01
  %v1099 = vmul.f32 %v1059, 0.01
  %v1100 = vmul.f32 %v1061, 0.01
  %v1101 = vmax.f32 %v969, %v1063
  %v1102 = vmax.f32 %v971, %v1064
  %v1103 = vmax.f32 %v974, %v1065
  %v1104 = vmax.f32 %v976, %v1066
  %v1105 = vmax.f32 %v979, %v1067
  %v1106 = vmax.f32 %v981, %v1068
  %v1107 = vmax.f32 %v984, %v1069
  %v1108 = vmax.f32 %v986, %v1070
  %v1109 = vmax.f32 %v989, %v1071
  %v1110 = vmax.f32 %v991, %v1072
  %v1111 = vmax.f32 %v994, %v1073
  %v1112 = vmax.f32 %v996, %v1074
  %v1113 = vmax.f32 %v999, %v1075
  %v1114 = vmax.f32 %v1001, %v1076
  %v1115 = vmax.f32 %v1004, %v1077
  %v1116 = vmax.f32 %v1006, %v1078
  %v1117 = vmax.f32 %v1009, %v1079
  %v1118 = vmax.f32 %v1011, %v1080
  %v1119 = vmax.f32 %v1014, %v1081
  %v1120 = vmax.f32 %v1016, %v1082
  %v1121 = vmax.f32 %v1019, %v1083
  %v1122 = vmax.f32 %v1021, %v1084
  %v1123 = vmax.f32 %v1024, %v1085
  %v1124 = vmax.f32 %v1026, %v1086
  %v1125 = vmax.f32 %v1029, %v1087
  %v1126 = vmax.f32 %v1031, %v1088
  %v1127 = vmax.f32 %v1034, %v1089
  %v1128 = vmax.f32 %v1036, %v1090
  %v1129 = vmax.f32 %v1039, %v1091
  %v1130 = vmax.f32 %v1041, %v1092
  %v1131 = vmax.f32 %v1044, %v1093
  %v1132 = vmax.f32 %v1046, %v1094
  %v1133 = vmax.f32 %v1049, %v1095
  %v1134 = vmax.f32 %v1051, %v1096
  %v1135 = vmax.f32 %v1054, %v1097
  %v1136 = vmax.f32 %v1056, %v1098
  %v1137 = vmax.f32 %v1059, %v1099
  %v1138 = vmax.f32 %v1061, %v1100
  %v1139 = vpack.c.bf16 %v1102, %v1101
  %v1140 = vpack.c.bf16 %v1104, %v1103
  %v1141 = vpack.c.bf16 %v1106, %v1105
  %v1142 = vpack.c.bf16 %v1108, %v1107
  %v1143 = vpack.c.bf16 %v1110, %v1109
  %v1144 = vpack.c.bf16 %v1112, %v1111
  %v1145 = vpack.c.bf16 %v1114, %v1113
  %v1146 = vpack.c.bf16 %v1116, %v1115
  %v1147 = vpack.c.bf16 %v1118, %v1117
  %v1148 = vpack.c.bf16 %v1120, %v1119
  %v1149 = vpack.c.bf16 %v1122, %v1121
  %v1150 = vpack.c.bf16 %v1124, %v1123
  %v1151 = vpack.c.bf16 %v1126, %v1125
  %v1152 = vpack.c.bf16 %v1128, %v1127
  %v1153 = vpack.c.bf16 %v1130, %v1129
  %v1154 = vpack.c.bf16 %v1132, %v1131
  %v1155 = vpack.c.bf16 %v1134, %v1133
  %v1156 = vpack.c.bf16 %v1136, %v1135
  %v1157 = vpack.c.bf16 %v1138, %v1137
  %s1158 = scalar_lea.vmem %s2, 192
  %v1159 = vld [vmem:[%s1158] sm:$0xf]
  %v1160 = vld [vmem:[%s1158 + $0x4] sm:$0xf]
  %v1161 = vld [vmem:[%s1158 + $0x8] sm:$0xf]
  %v1162 = vld [vmem:[%s1158 + $0xc] sm:$0xf]
  %v1163 = vld [vmem:[%s1158 + $0x10] sm:$0xf]
  %v1164 = vld [vmem:[%s1158 + $0x14] sm:$0xf]
  %v1165 = vld [vmem:[%s1158 + $0x18] sm:$0xf]
  %v1166 = vld [vmem:[%s1158 + $0x1c] sm:$0xf]
  %v1167 = vld [vmem:[%s1158 + $0x20] sm:$0xf]
  %v1168 = vld [vmem:[%s1158 + $0x24] sm:$0xf]
  %v1169 = vld [vmem:[%s1158 + $0x28] sm:$0xf]
  %v1170 = vld [vmem:[%s1158 + $0x2c] sm:$0xf]
  %v1171 = vld [vmem:[%s1158 + $0x30] sm:$0xf]
  %v1172 = vld [vmem:[%s1158 + $0x34] sm:$0xf]
  %v1173 = vld [vmem:[%s1158 + $0x38] sm:$0xf]
  %v1174 = vld [vmem:[%s1158 + $0x3c] sm:$0xf]
  %v1175 = vperm.slane %v21, 4
  %v1192 = vunpack.c.l.b16 %v1159
  %v1193 = vunpack.c.l.b16 %v1160
  %v1194 = vunpack.c.l.b16 %v1161
  %v1195 = vunpack.c.l.b16 %v1162
  %v1196 = vunpack.c.l.b16 %v1163
  %v1197 = vunpack.c.l.b16 %v1164
  %v1198 = vunpack.c.l.b16 %v1165
  %v1199 = vunpack.c.l.b16 %v1166
  %v1200 = vunpack.c.l.b16 %v1167
  %v1201 = vunpack.c.l.b16 %v1168
  %v1202 = vunpack.c.l.b16 %v1169
  %v1203 = vunpack.c.l.b16 %v1170
  %v1204 = vunpack.c.l.b16 %v1171
  %v1205 = vunpack.c.l.b16 %v1172
  %v1206 = vunpack.c.l.b16 %v1173
  %v1207 = vunpack.c.l.b16 %v1174
  %v1208 = vpack.c.b16 %v1193, %v1192
  %v1209 = vpack.c.b16 %v1195, %v1194
  %v1210 = vpack.c.b16 %v1197, %v1196
  %v1211 = vpack.c.b16 %v1199, %v1198
  %v1212 = vpack.c.b16 %v1201, %v1200
  %v1213 = vpack.c.b16 %v1203, %v1202
  %v1214 = vpack.c.b16 %v1205, %v1204
  %v1215 = vpack.c.b16 %v1207, %v1206
  %1224 = vmatpush.bf16.msra.mxu0 %v1215
  %1225 = vmatpush.bf16.msra.mxu0 %v1214
  %1226 = vmatpush.bf16.msra.mxu0 %v1213
  %1227 = vmatpush.bf16.msra.mxu0 %v1212
  %1228 = vmatpush.bf16.msra.mxu0 %v1211
  %1229 = vmatpush.bf16.msra.mxu0 %v1210
  %1230 = vmatpush.bf16.msra.mxu0 %v1209
  %1231 = vmatpush.bf16.msra.mxu0 %v1208
  %1232 = vmatmul.bf16.gmra.mxu0 %v1139
  %v1233 = vpop.f32.mrf.mxu0
  %v1234 = vadd.f32 %v1175, %v1233
  %v1235 = vpop.f32.mrf.mxu0
  %v1236 = vadd.f32 %v1175, %v1235
  %1237 = vmatmul.bf16.gmra.mxu0 %v1140
  %v1238 = vpop.f32.mrf.mxu0
  %v1239 = vadd.f32 %v1175, %v1238
  %v1240 = vpop.f32.mrf.mxu0
  %v1241 = vadd.f32 %v1175, %v1240
  %1242 = vmatmul.bf16.gmra.mxu0 %v1141
  %v1243 = vpop.f32.mrf.mxu0
  %v1244 = vadd.f32 %v1175, %v1243
  %v1245 = vpop.f32.mrf.mxu0
  %v1246 = vadd.f32 %v1175, %v1245
  %1247 = vmatmul.bf16.gmra.mxu0 %v1142
  %v1248 = vpop.f32.mrf.mxu0
  %v1249 = vadd.f32 %v1175, %v1248
  %v1250 = vpop.f32.mrf.mxu0
  %v1251 = vadd.f32 %v1175, %v1250
  %1252 = vmatmul.bf16.gmra.mxu0 %v1143
  %v1253 = vpop.f32.mrf.mxu0
  %v1254 = vadd.f32 %v1175, %v1253
  %v1255 = vpop.f32.mrf.mxu0
  %v1256 = vadd.f32 %v1175, %v1255
  %1257 = vmatmul.bf16.gmra.mxu0 %v1144
  %v1258 = vpop.f32.mrf.mxu0
  %v1259 = vadd.f32 %v1175, %v1258
  %v1260 = vpop.f32.mrf.mxu0
  %v1261 = vadd.f32 %v1175, %v1260
  %1262 = vmatmul.bf16.gmra.mxu0 %v1145
  %v1263 = vpop.f32.mrf.mxu0
  %v1264 = vadd.f32 %v1175, %v1263
  %v1265 = vpop.f32.mrf.mxu0
  %v1266 = vadd.f32 %v1175, %v1265
  %1267 = vmatmul.bf16.gmra.mxu0 %v1146
  %v1268 = vpop.f32.mrf.mxu0
  %v1269 = vadd.f32 %v1175, %v1268
  %v1270 = vpop.f32.mrf.mxu0
  %v1271 = vadd.f32 %v1175, %v1270
  %1272 = vmatmul.bf16.gmra.mxu0 %v1147
  %v1273 = vpop.f32.mrf.mxu0
  %v1274 = vadd.f32 %v1175, %v1273
  %v1275 = vpop.f32.mrf.mxu0
  %v1276 = vadd.f32 %v1175, %v1275
  %1277 = vmatmul.bf16.gmra.mxu0 %v1148
  %v1278 = vpop.f32.mrf.mxu0
  %v1279 = vadd.f32 %v1175, %v1278
  %v1280 = vpop.f32.mrf.mxu0
  %v1281 = vadd.f32 %v1175, %v1280
  %1282 = vmatmul.bf16.gmra.mxu0 %v1149
  %v1283 = vpop.f32.mrf.mxu0
  %v1284 = vadd.f32 %v1175, %v1283
  %v1285 = vpop.f32.mrf.mxu0
  %v1286 = vadd.f32 %v1175, %v1285
  %1287 = vmatmul.bf16.gmra.mxu0 %v1150
  %v1288 = vpop.f32.mrf.mxu0
  %v1289 = vadd.f32 %v1175, %v1288
  %v1290 = vpop.f32.mrf.mxu0
  %v1291 = vadd.f32 %v1175, %v1290
  %1292 = vmatmul.bf16.gmra.mxu0 %v1151
  %v1293 = vpop.f32.mrf.mxu0
  %v1294 = vadd.f32 %v1175, %v1293
  %v1295 = vpop.f32.mrf.mxu0
  %v1296 = vadd.f32 %v1175, %v1295
  %1297 = vmatmul.bf16.gmra.mxu0 %v1152
  %v1298 = vpop.f32.mrf.mxu0
  %v1299 = vadd.f32 %v1175, %v1298
  %v1300 = vpop.f32.mrf.mxu0
  %v1301 = vadd.f32 %v1175, %v1300
  %1302 = vmatmul.bf16.gmra.mxu0 %v1153
  %v1303 = vpop.f32.mrf.mxu0
  %v1304 = vadd.f32 %v1175, %v1303
  %v1305 = vpop.f32.mrf.mxu0
  %v1306 = vadd.f32 %v1175, %v1305
  %1307 = vmatmul.bf16.gmra.mxu0 %v1154
  %v1308 = vpop.f32.mrf.mxu0
  %v1309 = vadd.f32 %v1175, %v1308
  %v1310 = vpop.f32.mrf.mxu0
  %v1311 = vadd.f32 %v1175, %v1310
  %1312 = vmatmul.bf16.gmra.mxu0 %v1155
  %v1313 = vpop.f32.mrf.mxu0
  %v1314 = vadd.f32 %v1175, %v1313
  %v1315 = vpop.f32.mrf.mxu0
  %v1316 = vadd.f32 %v1175, %v1315
  %1317 = vmatmul.bf16.gmra.mxu0 %v1156
  %v1318 = vpop.f32.mrf.mxu0
  %v1319 = vadd.f32 %v1175, %v1318
  %v1320 = vpop.f32.mrf.mxu0
  %v1321 = vadd.f32 %v1175, %v1320
  %1322 = vmatmul.bf16.gmra.mxu0 %v1157
  %v1323 = vpop.f32.mrf.mxu0
  %v1324 = vadd.f32 %v1175, %v1323
  %v1325 = vpop.f32.mrf.mxu0
  %v1326 = vadd.f32 %v1175, %v1325
  %1327 = vdwg.mxu0
  %v1328 = vmul.f32 %v1234, 0.01
  %v1329 = vmul.f32 %v1236, 0.01
  %v1330 = vmul.f32 %v1239, 0.01
  %v1331 = vmul.f32 %v1241, 0.01
  %v1332 = vmul.f32 %v1244, 0.01
  %v1333 = vmul.f32 %v1246, 0.01
  %v1334 = vmul.f32 %v1249, 0.01
  %v1335 = vmul.f32 %v1251, 0.01
  %v1336 = vmul.f32 %v1254, 0.01
  %v1337 = vmul.f32 %v1256, 0.01
  %v1338 = vmul.f32 %v1259, 0.01
  %v1339 = vmul.f32 %v1261, 0.01
  %v1340 = vmul.f32 %v1264, 0.01
  %v1341 = vmul.f32 %v1266, 0.01
  %v1342 = vmul.f32 %v1269, 0.01
  %v1343 = vmul.f32 %v1271, 0.01
  %v1344 = vmul.f32 %v1274, 0.01
  %v1345 = vmul.f32 %v1276, 0.01
  %v1346 = vmul.f32 %v1279, 0.01
  %v1347 = vmul.f32 %v1281, 0.01
  %v1348 = vmul.f32 %v1284, 0.01
  %v1349 = vmul.f32 %v1286, 0.01
  %v1350 = vmul.f32 %v1289, 0.01
  %v1351 = vmul.f32 %v1291, 0.01
  %v1352 = vmul.f32 %v1294, 0.01
  %v1353 = vmul.f32 %v1296, 0.01
  %v1354 = vmul.f32 %v1299, 0.01
  %v1355 = vmul.f32 %v1301, 0.01
  %v1356 = vmul.f32 %v1304, 0.01
  %v1357 = vmul.f32 %v1306, 0.01
  %v1358 = vmul.f32 %v1309, 0.01
  %v1359 = vmul.f32 %v1311, 0.01
  %v1360 = vmul.f32 %v1314, 0.01
  %v1361 = vmul.f32 %v1316, 0.01
  %v1362 = vmul.f32 %v1319, 0.01
  %v1363 = vmul.f32 %v1321, 0.01
  %v1364 = vmul.f32 %v1324, 0.01
  %v1365 = vmul.f32 %v1326, 0.01
  %v1366 = vmax.f32 %v1234, %v1328
  %v1367 = vmax.f32 %v1236, %v1329
  %v1368 = vmax.f32 %v1239, %v1330
  %v1369 = vmax.f32 %v1241, %v1331
  %v1370 = vmax.f32 %v1244, %v1332
  %v1371 = vmax.f32 %v1246, %v1333
  %v1372 = vmax.f32 %v1249, %v1334
  %v1373 = vmax.f32 %v1251, %v1335
  %v1374 = vmax.f32 %v1254, %v1336
  %v1375 = vmax.f32 %v1256, %v1337
  %v1376 = vmax.f32 %v1259, %v1338
  %v1377 = vmax.f32 %v1261, %v1339
  %v1378 = vmax.f32 %v1264, %v1340
  %v1379 = vmax.f32 %v1266, %v1341
  %v1380 = vmax.f32 %v1269, %v1342
  %v1381 = vmax.f32 %v1271, %v1343
  %v1382 = vmax.f32 %v1274, %v1344
  %v1383 = vmax.f32 %v1276, %v1345
  %v1384 = vmax.f32 %v1279, %v1346
  %v1385 = vmax.f32 %v1281, %v1347
  %v1386 = vmax.f32 %v1284, %v1348
  %v1387 = vmax.f32 %v1286, %v1349
  %v1388 = vmax.f32 %v1289, %v1350
  %v1389 = vmax.f32 %v1291, %v1351
  %v1390 = vmax.f32 %v1294, %v1352
  %v1391 = vmax.f32 %v1296, %v1353
  %v1392 = vmax.f32 %v1299, %v1354
  %v1393 = vmax.f32 %v1301, %v1355
  %v1394 = vmax.f32 %v1304, %v1356
  %v1395 = vmax.f32 %v1306, %v1357
  %v1396 = vmax.f32 %v1309, %v1358
  %v1397 = vmax.f32 %v1311, %v1359
  %v1398 = vmax.f32 %v1314, %v1360
  %v1399 = vmax.f32 %v1316, %v1361
  %v1400 = vmax.f32 %v1319, %v1362
  %v1401 = vmax.f32 %v1321, %v1363
  %v1402 = vmax.f32 %v1324, %v1364
  %v1403 = vmax.f32 %v1326, %v1365
  %v1404 = vpack.c.bf16 %v1367, %v1366
  %v1405 = vpack.c.bf16 %v1369, %v1368
  %v1406 = vpack.c.bf16 %v1371, %v1370
  %v1407 = vpack.c.bf16 %v1373, %v1372
  %v1408 = vpack.c.bf16 %v1375, %v1374
  %v1409 = vpack.c.bf16 %v1377, %v1376
  %v1410 = vpack.c.bf16 %v1379, %v1378
  %v1411 = vpack.c.bf16 %v1381, %v1380
  %v1412 = vpack.c.bf16 %v1383, %v1382
  %v1413 = vpack.c.bf16 %v1385, %v1384
  %v1414 = vpack.c.bf16 %v1387, %v1386
  %v1415 = vpack.c.bf16 %v1389, %v1388
  %v1416 = vpack.c.bf16 %v1391, %v1390
  %v1417 = vpack.c.bf16 %v1393, %v1392
  %v1418 = vpack.c.bf16 %v1395, %v1394
  %v1419 = vpack.c.bf16 %v1397, %v1396
  %v1420 = vpack.c.bf16 %v1399, %v1398
  %v1421 = vpack.c.bf16 %v1401, %v1400
  %v1422 = vpack.c.bf16 %v1403, %v1402
  %s1423 = scalar_lea.vmem %s2, 256
  %v1424 = vld [vmem:[%s1423] sm:$0xf]
  %v1425 = vld [vmem:[%s1423 + $0x4] sm:$0xf]
  %v1426 = vld [vmem:[%s1423 + $0x8] sm:$0xf]
  %v1427 = vld [vmem:[%s1423 + $0xc] sm:$0xf]
  %v1428 = vld [vmem:[%s1423 + $0x10] sm:$0xf]
  %v1429 = vld [vmem:[%s1423 + $0x14] sm:$0xf]
  %v1430 = vld [vmem:[%s1423 + $0x18] sm:$0xf]
  %v1431 = vld [vmem:[%s1423 + $0x1c] sm:$0xf]
  %v1432 = vld [vmem:[%s1423 + $0x20] sm:$0xf]
  %v1433 = vld [vmem:[%s1423 + $0x24] sm:$0xf]
  %v1434 = vld [vmem:[%s1423 + $0x28] sm:$0xf]
  %v1435 = vld [vmem:[%s1423 + $0x2c] sm:$0xf]
  %v1436 = vld [vmem:[%s1423 + $0x30] sm:$0xf]
  %v1437 = vld [vmem:[%s1423 + $0x34] sm:$0xf]
  %v1438 = vld [vmem:[%s1423 + $0x38] sm:$0xf]
  %v1439 = vld [vmem:[%s1423 + $0x3c] sm:$0xf]
  %v1440 = vperm.slane %v21, 5
  %v1457 = vunpack.c.l.b16 %v1424
  %v1458 = vunpack.c.l.b16 %v1425
  %v1459 = vunpack.c.l.b16 %v1426
  %v1460 = vunpack.c.l.b16 %v1427
  %v1461 = vunpack.c.l.b16 %v1428
  %v1462 = vunpack.c.l.b16 %v1429
  %v1463 = vunpack.c.l.b16 %v1430
  %v1464 = vunpack.c.l.b16 %v1431
  %v1465 = vunpack.c.l.b16 %v1432
  %v1466 = vunpack.c.l.b16 %v1433
  %v1467 = vunpack.c.l.b16 %v1434
  %v1468 = vunpack.c.l.b16 %v1435
  %v1469 = vunpack.c.l.b16 %v1436
  %v1470 = vunpack.c.l.b16 %v1437
  %v1471 = vunpack.c.l.b16 %v1438
  %v1472 = vunpack.c.l.b16 %v1439
  %v1473 = vpack.c.b16 %v1458, %v1457
  %v1474 = vpack.c.b16 %v1460, %v1459
  %v1475 = vpack.c.b16 %v1462, %v1461
  %v1476 = vpack.c.b16 %v1464, %v1463
  %v1477 = vpack.c.b16 %v1466, %v1465
  %v1478 = vpack.c.b16 %v1468, %v1467
  %v1479 = vpack.c.b16 %v1470, %v1469
  %v1480 = vpack.c.b16 %v1472, %v1471
  %1489 = vmatpush.bf16.msra.mxu0 %v1480
  %1490 = vmatpush.bf16.msra.mxu0 %v1479
  %1491 = vmatpush.bf16.msra.mxu0 %v1478
  %1492 = vmatpush.bf16.msra.mxu0 %v1477
  %1493 = vmatpush.bf16.msra.mxu0 %v1476
  %1494 = vmatpush.bf16.msra.mxu0 %v1475
  %1495 = vmatpush.bf16.msra.mxu0 %v1474
  %1496 = vmatpush.bf16.msra.mxu0 %v1473
  %1497 = vmatmul.bf16.gmra.mxu0 %v1404
  %v1498 = vpop.f32.mrf.mxu0
  %v1499 = vadd.f32 %v1440, %v1498
  %v1500 = vpop.f32.mrf.mxu0
  %v1501 = vadd.f32 %v1440, %v1500
  %1502 = vmatmul.bf16.gmra.mxu0 %v1405
  %v1503 = vpop.f32.mrf.mxu0
  %v1504 = vadd.f32 %v1440, %v1503
  %v1505 = vpop.f32.mrf.mxu0
  %v1506 = vadd.f32 %v1440, %v1505
  %1507 = vmatmul.bf16.gmra.mxu0 %v1406
  %v1508 = vpop.f32.mrf.mxu0
  %v1509 = vadd.f32 %v1440, %v1508
  %v1510 = vpop.f32.mrf.mxu0
  %v1511 = vadd.f32 %v1440, %v1510
  %1512 = vmatmul.bf16.gmra.mxu0 %v1407
  %v1513 = vpop.f32.mrf.mxu0
  %v1514 = vadd.f32 %v1440, %v1513
  %v1515 = vpop.f32.mrf.mxu0
  %v1516 = vadd.f32 %v1440, %v1515
  %1517 = vmatmul.bf16.gmra.mxu0 %v1408
  %v1518 = vpop.f32.mrf.mxu0
  %v1519 = vadd.f32 %v1440, %v1518
  %v1520 = vpop.f32.mrf.mxu0
  %v1521 = vadd.f32 %v1440, %v1520
  %1522 = vmatmul.bf16.gmra.mxu0 %v1409
  %v1523 = vpop.f32.mrf.mxu0
  %v1524 = vadd.f32 %v1440, %v1523
  %v1525 = vpop.f32.mrf.mxu0
  %v1526 = vadd.f32 %v1440, %v1525
  %1527 = vmatmul.bf16.gmra.mxu0 %v1410
  %v1528 = vpop.f32.mrf.mxu0
  %v1529 = vadd.f32 %v1440, %v1528
  %v1530 = vpop.f32.mrf.mxu0
  %v1531 = vadd.f32 %v1440, %v1530
  %1532 = vmatmul.bf16.gmra.mxu0 %v1411
  %v1533 = vpop.f32.mrf.mxu0
  %v1534 = vadd.f32 %v1440, %v1533
  %v1535 = vpop.f32.mrf.mxu0
  %v1536 = vadd.f32 %v1440, %v1535
  %1537 = vmatmul.bf16.gmra.mxu0 %v1412
  %v1538 = vpop.f32.mrf.mxu0
  %v1539 = vadd.f32 %v1440, %v1538
  %v1540 = vpop.f32.mrf.mxu0
  %v1541 = vadd.f32 %v1440, %v1540
  %1542 = vmatmul.bf16.gmra.mxu0 %v1413
  %v1543 = vpop.f32.mrf.mxu0
  %v1544 = vadd.f32 %v1440, %v1543
  %v1545 = vpop.f32.mrf.mxu0
  %v1546 = vadd.f32 %v1440, %v1545
  %1547 = vmatmul.bf16.gmra.mxu0 %v1414
  %v1548 = vpop.f32.mrf.mxu0
  %v1549 = vadd.f32 %v1440, %v1548
  %v1550 = vpop.f32.mrf.mxu0
  %v1551 = vadd.f32 %v1440, %v1550
  %1552 = vmatmul.bf16.gmra.mxu0 %v1415
  %v1553 = vpop.f32.mrf.mxu0
  %v1554 = vadd.f32 %v1440, %v1553
  %v1555 = vpop.f32.mrf.mxu0
  %v1556 = vadd.f32 %v1440, %v1555
  %1557 = vmatmul.bf16.gmra.mxu0 %v1416
  %v1558 = vpop.f32.mrf.mxu0
  %v1559 = vadd.f32 %v1440, %v1558
  %v1560 = vpop.f32.mrf.mxu0
  %v1561 = vadd.f32 %v1440, %v1560
  %1562 = vmatmul.bf16.gmra.mxu0 %v1417
  %v1563 = vpop.f32.mrf.mxu0
  %v1564 = vadd.f32 %v1440, %v1563
  %v1565 = vpop.f32.mrf.mxu0
  %v1566 = vadd.f32 %v1440, %v1565
  %1567 = vmatmul.bf16.gmra.mxu0 %v1418
  %v1568 = vpop.f32.mrf.mxu0
  %v1569 = vadd.f32 %v1440, %v1568
  %v1570 = vpop.f32.mrf.mxu0
  %v1571 = vadd.f32 %v1440, %v1570
  %1572 = vmatmul.bf16.gmra.mxu0 %v1419
  %v1573 = vpop.f32.mrf.mxu0
  %v1574 = vadd.f32 %v1440, %v1573
  %v1575 = vpop.f32.mrf.mxu0
  %v1576 = vadd.f32 %v1440, %v1575
  %1577 = vmatmul.bf16.gmra.mxu0 %v1420
  %v1578 = vpop.f32.mrf.mxu0
  %v1579 = vadd.f32 %v1440, %v1578
  %v1580 = vpop.f32.mrf.mxu0
  %v1581 = vadd.f32 %v1440, %v1580
  %1582 = vmatmul.bf16.gmra.mxu0 %v1421
  %v1583 = vpop.f32.mrf.mxu0
  %v1584 = vadd.f32 %v1440, %v1583
  %v1585 = vpop.f32.mrf.mxu0
  %v1586 = vadd.f32 %v1440, %v1585
  %1587 = vmatmul.bf16.gmra.mxu0 %v1422
  %v1588 = vpop.f32.mrf.mxu0
  %v1589 = vadd.f32 %v1440, %v1588
  %v1590 = vpop.f32.mrf.mxu0
  %v1591 = vadd.f32 %v1440, %v1590
  %1592 = vdwg.mxu0
  %v1593 = vmul.f32 %v1499, 0.01
  %v1594 = vmul.f32 %v1501, 0.01
  %v1595 = vmul.f32 %v1504, 0.01
  %v1596 = vmul.f32 %v1506, 0.01
  %v1597 = vmul.f32 %v1509, 0.01
  %v1598 = vmul.f32 %v1511, 0.01
  %v1599 = vmul.f32 %v1514, 0.01
  %v1600 = vmul.f32 %v1516, 0.01
  %v1601 = vmul.f32 %v1519, 0.01
  %v1602 = vmul.f32 %v1521, 0.01
  %v1603 = vmul.f32 %v1524, 0.01
  %v1604 = vmul.f32 %v1526, 0.01
  %v1605 = vmul.f32 %v1529, 0.01
  %v1606 = vmul.f32 %v1531, 0.01
  %v1607 = vmul.f32 %v1534, 0.01
  %v1608 = vmul.f32 %v1536, 0.01
  %v1609 = vmul.f32 %v1539, 0.01
  %v1610 = vmul.f32 %v1541, 0.01
  %v1611 = vmul.f32 %v1544, 0.01
  %v1612 = vmul.f32 %v1546, 0.01
  %v1613 = vmul.f32 %v1549, 0.01
  %v1614 = vmul.f32 %v1551, 0.01
  %v1615 = vmul.f32 %v1554, 0.01
  %v1616 = vmul.f32 %v1556, 0.01
  %v1617 = vmul.f32 %v1559, 0.01
  %v1618 = vmul.f32 %v1561, 0.01
  %v1619 = vmul.f32 %v1564, 0.01
  %v1620 = vmul.f32 %v1566, 0.01
  %v1621 = vmul.f32 %v1569, 0.01
  %v1622 = vmul.f32 %v1571, 0.01
  %v1623 = vmul.f32 %v1574, 0.01
  %v1624 = vmul.f32 %v1576, 0.01
  %v1625 = vmul.f32 %v1579, 0.01
  %v1626 = vmul.f32 %v1581, 0.01
  %v1627 = vmul.f32 %v1584, 0.01
  %v1628 = vmul.f32 %v1586, 0.01
  %v1629 = vmul.f32 %v1589, 0.01
  %v1630 = vmul.f32 %v1591, 0.01
  %v1631 = vmax.f32 %v1499, %v1593
  %v1632 = vmax.f32 %v1501, %v1594
  %v1633 = vmax.f32 %v1504, %v1595
  %v1634 = vmax.f32 %v1506, %v1596
  %v1635 = vmax.f32 %v1509, %v1597
  %v1636 = vmax.f32 %v1511, %v1598
  %v1637 = vmax.f32 %v1514, %v1599
  %v1638 = vmax.f32 %v1516, %v1600
  %v1639 = vmax.f32 %v1519, %v1601
  %v1640 = vmax.f32 %v1521, %v1602
  %v1641 = vmax.f32 %v1524, %v1603
  %v1642 = vmax.f32 %v1526, %v1604
  %v1643 = vmax.f32 %v1529, %v1605
  %v1644 = vmax.f32 %v1531, %v1606
  %v1645 = vmax.f32 %v1534, %v1607
  %v1646 = vmax.f32 %v1536, %v1608
  %v1647 = vmax.f32 %v1539, %v1609
  %v1648 = vmax.f32 %v1541, %v1610
  %v1649 = vmax.f32 %v1544, %v1611
  %v1650 = vmax.f32 %v1546, %v1612
  %v1651 = vmax.f32 %v1549, %v1613
  %v1652 = vmax.f32 %v1551, %v1614
  %v1653 = vmax.f32 %v1554, %v1615
  %v1654 = vmax.f32 %v1556, %v1616
  %v1655 = vmax.f32 %v1559, %v1617
  %v1656 = vmax.f32 %v1561, %v1618
  %v1657 = vmax.f32 %v1564, %v1619
  %v1658 = vmax.f32 %v1566, %v1620
  %v1659 = vmax.f32 %v1569, %v1621
  %v1660 = vmax.f32 %v1571, %v1622
  %v1661 = vmax.f32 %v1574, %v1623
  %v1662 = vmax.f32 %v1576, %v1624
  %v1663 = vmax.f32 %v1579, %v1625
  %v1664 = vmax.f32 %v1581, %v1626
  %v1665 = vmax.f32 %v1584, %v1627
  %v1666 = vmax.f32 %v1586, %v1628
  %v1667 = vmax.f32 %v1589, %v1629
  %v1668 = vmax.f32 %v1591, %v1630
  %v1669 = vld [vmem:[%s4] sm:$0x1]
  %v1671 = vperm.slane %v1669, 0
  %v1673 = vmul.f32 %v1631, %v1671
  %v1674 = vmul.f32 %v1632, %v1671
  %v1675 = vmul.f32 %v1633, %v1671
  %v1676 = vmul.f32 %v1634, %v1671
  %v1677 = vmul.f32 %v1635, %v1671
  %v1678 = vmul.f32 %v1636, %v1671
  %v1679 = vmul.f32 %v1637, %v1671
  %v1680 = vmul.f32 %v1638, %v1671
  %v1681 = vmul.f32 %v1639, %v1671
  %v1682 = vmul.f32 %v1640, %v1671
  %v1683 = vmul.f32 %v1641, %v1671
  %v1684 = vmul.f32 %v1642, %v1671
  %v1685 = vmul.f32 %v1643, %v1671
  %v1686 = vmul.f32 %v1644, %v1671
  %v1687 = vmul.f32 %v1645, %v1671
  %v1688 = vmul.f32 %v1646, %v1671
  %v1689 = vmul.f32 %v1647, %v1671
  %v1690 = vmul.f32 %v1648, %v1671
  %v1691 = vmul.f32 %v1649, %v1671
  %v1692 = vmul.f32 %v1650, %v1671
  %v1693 = vmul.f32 %v1651, %v1671
  %v1694 = vmul.f32 %v1652, %v1671
  %v1695 = vmul.f32 %v1653, %v1671
  %v1696 = vmul.f32 %v1654, %v1671
  %v1697 = vmul.f32 %v1655, %v1671
  %v1698 = vmul.f32 %v1656, %v1671
  %v1699 = vmul.f32 %v1657, %v1671
  %v1700 = vmul.f32 %v1658, %v1671
  %v1701 = vmul.f32 %v1659, %v1671
  %v1702 = vmul.f32 %v1660, %v1671
  %v1703 = vmul.f32 %v1661, %v1671
  %v1704 = vmul.f32 %v1662, %v1671
  %v1705 = vmul.f32 %v1663, %v1671
  %v1706 = vmul.f32 %v1664, %v1671
  %v1707 = vmul.f32 %v1665, %v1671
  %v1708 = vmul.f32 %v1666, %v1671
  %v1709 = vmul.f32 %v1667, %v1671
  %v1710 = vmul.f32 %v1668, %v1671
  %1711 = vadd.xlane.f32.xlu0 %v1673
  %v1712 = vpop.xlane.xlu0 %1711
  %1713 = vadd.xlane.f32.xlu0 %v1674
  %v1714 = vpop.xlane.xlu0 %1713
  %1715 = vadd.xlane.f32.xlu0 %v1675
  %v1716 = vpop.xlane.xlu0 %1715
  %1717 = vadd.xlane.f32.xlu0 %v1676
  %v1718 = vpop.xlane.xlu0 %1717
  %1719 = vadd.xlane.f32.xlu0 %v1677
  %v1720 = vpop.xlane.xlu0 %1719
  %1721 = vadd.xlane.f32.xlu0 %v1678
  %v1722 = vpop.xlane.xlu0 %1721
  %1723 = vadd.xlane.f32.xlu0 %v1679
  %v1724 = vpop.xlane.xlu0 %1723
  %1725 = vadd.xlane.f32.xlu0 %v1680
  %v1726 = vpop.xlane.xlu0 %1725
  %1727 = vadd.xlane.f32.xlu0 %v1681
  %v1728 = vpop.xlane.xlu0 %1727
  %1729 = vadd.xlane.f32.xlu0 %v1682
  %v1730 = vpop.xlane.xlu0 %1729
  %1731 = vadd.xlane.f32.xlu0 %v1683
  %v1732 = vpop.xlane.xlu0 %1731
  %1733 = vadd.xlane.f32.xlu0 %v1684
  %v1734 = vpop.xlane.xlu0 %1733
  %1735 = vadd.xlane.f32.xlu0 %v1685
  %v1736 = vpop.xlane.xlu0 %1735
  %1737 = vadd.xlane.f32.xlu0 %v1686
  %v1738 = vpop.xlane.xlu0 %1737
  %1739 = vadd.xlane.f32.xlu0 %v1687
  %v1740 = vpop.xlane.xlu0 %1739
  %1741 = vadd.xlane.f32.xlu0 %v1688
  %v1742 = vpop.xlane.xlu0 %1741
  %1743 = vadd.xlane.f32.xlu0 %v1689
  %v1744 = vpop.xlane.xlu0 %1743
  %1745 = vadd.xlane.f32.xlu0 %v1690
  %v1746 = vpop.xlane.xlu0 %1745
  %1747 = vadd.xlane.f32.xlu0 %v1691
  %v1748 = vpop.xlane.xlu0 %1747
  %1749 = vadd.xlane.f32.xlu0 %v1692
  %v1750 = vpop.xlane.xlu0 %1749
  %1751 = vadd.xlane.f32.xlu0 %v1693
  %v1752 = vpop.xlane.xlu0 %1751
  %1753 = vadd.xlane.f32.xlu0 %v1694
  %v1754 = vpop.xlane.xlu0 %1753
  %1755 = vadd.xlane.f32.xlu0 %v1695
  %v1756 = vpop.xlane.xlu0 %1755
  %1757 = vadd.xlane.f32.xlu0 %v1696
  %v1758 = vpop.xlane.xlu0 %1757
  %1759 = vadd.xlane.f32.xlu0 %v1697
  %v1760 = vpop.xlane.xlu0 %1759
  %1761 = vadd.xlane.f32.xlu0 %v1698
  %v1762 = vpop.xlane.xlu0 %1761
  %1763 = vadd.xlane.f32.xlu0 %v1699
  %v1764 = vpop.xlane.xlu0 %1763
  %1765 = vadd.xlane.f32.xlu0 %v1700
  %v1766 = vpop.xlane.xlu0 %1765
  %1767 = vadd.xlane.f32.xlu0 %v1701
  %v1768 = vpop.xlane.xlu0 %1767
  %1769 = vadd.xlane.f32.xlu0 %v1702
  %v1770 = vpop.xlane.xlu0 %1769
  %1771 = vadd.xlane.f32.xlu0 %v1703
  %v1772 = vpop.xlane.xlu0 %1771
  %1773 = vadd.xlane.f32.xlu0 %v1704
  %v1774 = vpop.xlane.xlu0 %1773
  %1775 = vadd.xlane.f32.xlu0 %v1705
  %v1776 = vpop.xlane.xlu0 %1775
  %1777 = vadd.xlane.f32.xlu0 %v1706
  %v1778 = vpop.xlane.xlu0 %1777
  %1779 = vadd.xlane.f32.xlu0 %v1707
  %v1780 = vpop.xlane.xlu0 %1779
  %1781 = vadd.xlane.f32.xlu0 %v1708
  %v1782 = vpop.xlane.xlu0 %1781
  %1783 = vadd.xlane.f32.xlu0 %v1709
  %v1784 = vpop.xlane.xlu0 %1783
  %1785 = vadd.xlane.f32.xlu0 %v1710
  %v1786 = vpop.xlane.xlu0 %1785
  %v1787 = vperm.slane %v21, 6
  %v1788 = vadd.f32 %v1712, %v1787
  %v1789 = vadd.f32 %v1714, %v1787
  %v1790 = vadd.f32 %v1716, %v1787
  %v1791 = vadd.f32 %v1718, %v1787
  %v1792 = vadd.f32 %v1720, %v1787
  %v1793 = vadd.f32 %v1722, %v1787
  %v1794 = vadd.f32 %v1724, %v1787
  %v1795 = vadd.f32 %v1726, %v1787
  %v1796 = vadd.f32 %v1728, %v1787
  %v1797 = vadd.f32 %v1730, %v1787
  %v1798 = vadd.f32 %v1732, %v1787
  %v1799 = vadd.f32 %v1734, %v1787
  %v1800 = vadd.f32 %v1736, %v1787
  %v1801 = vadd.f32 %v1738, %v1787
  %v1802 = vadd.f32 %v1740, %v1787
  %v1803 = vadd.f32 %v1742, %v1787
  %v1804 = vadd.f32 %v1744, %v1787
  %v1805 = vadd.f32 %v1746, %v1787
  %v1806 = vadd.f32 %v1748, %v1787
  %v1807 = vadd.f32 %v1750, %v1787
  %v1808 = vadd.f32 %v1752, %v1787
  %v1809 = vadd.f32 %v1754, %v1787
  %v1810 = vadd.f32 %v1756, %v1787
  %v1811 = vadd.f32 %v1758, %v1787
  %v1812 = vadd.f32 %v1760, %v1787
  %v1813 = vadd.f32 %v1762, %v1787
  %v1814 = vadd.f32 %v1764, %v1787
  %v1815 = vadd.f32 %v1766, %v1787
  %v1816 = vadd.f32 %v1768, %v1787
  %v1817 = vadd.f32 %v1770, %v1787
  %v1818 = vadd.f32 %v1772, %v1787
  %v1819 = vadd.f32 %v1774, %v1787
  %v1820 = vadd.f32 %v1776, %v1787
  %v1821 = vadd.f32 %v1778, %v1787
  %v1822 = vadd.f32 %v1780, %v1787
  %v1823 = vadd.f32 %v1782, %v1787
  %v1824 = vadd.f32 %v1784, %v1787
  %v1825 = vadd.f32 %v1786, %v1787
  %v1826 = vxor.u32 %v1788, 2147483648
  %v1827 = vxor.u32 %v1789, 2147483648
  %v1828 = vxor.u32 %v1790, 2147483648
  %v1829 = vxor.u32 %v1791, 2147483648
  %v1830 = vxor.u32 %v1792, 2147483648
  %v1831 = vxor.u32 %v1793, 2147483648
  %v1832 = vxor.u32 %v1794, 2147483648
  %v1833 = vxor.u32 %v1795, 2147483648
  %v1834 = vxor.u32 %v1796, 2147483648
  %v1835 = vxor.u32 %v1797, 2147483648
  %v1836 = vxor.u32 %v1798, 2147483648
  %v1837 = vxor.u32 %v1799, 2147483648
  %v1838 = vxor.u32 %v1800, 2147483648
  %v1839 = vxor.u32 %v1801, 2147483648
  %v1840 = vxor.u32 %v1802, 2147483648
  %v1841 = vxor.u32 %v1803, 2147483648
  %v1842 = vxor.u32 %v1804, 2147483648
  %v1843 = vxor.u32 %v1805, 2147483648
  %v1844 = vxor.u32 %v1806, 2147483648
  %v1845 = vxor.u32 %v1807, 2147483648
  %v1846 = vxor.u32 %v1808, 2147483648
  %v1847 = vxor.u32 %v1809, 2147483648
  %v1848 = vxor.u32 %v1810, 2147483648
  %v1849 = vxor.u32 %v1811, 2147483648
  %v1850 = vxor.u32 %v1812, 2147483648
  %v1851 = vxor.u32 %v1813, 2147483648
  %v1852 = vxor.u32 %v1814, 2147483648
  %v1853 = vxor.u32 %v1815, 2147483648
  %v1854 = vxor.u32 %v1816, 2147483648
  %v1855 = vxor.u32 %v1817, 2147483648
  %v1856 = vxor.u32 %v1818, 2147483648
  %v1857 = vxor.u32 %v1819, 2147483648
  %v1858 = vxor.u32 %v1820, 2147483648
  %v1859 = vxor.u32 %v1821, 2147483648
  %v1860 = vxor.u32 %v1822, 2147483648
  %v1861 = vxor.u32 %v1823, 2147483648
  %v1862 = vxor.u32 %v1824, 2147483648
  %v1863 = vxor.u32 %v1825, 2147483648
  %v1864 = vmul.f32 %v1826, 1.442695
  %v1865 = vpow.pop %v1864
  %v1866 = vmul.f32 %v1827, 1.442695
  %v1867 = vpow.pop %v1866
  %v1868 = vmul.f32 %v1828, 1.442695
  %v1869 = vpow.pop %v1868
  %v1870 = vmul.f32 %v1829, 1.442695
  %v1871 = vpow.pop %v1870
  %v1872 = vmul.f32 %v1830, 1.442695
  %v1873 = vpow.pop %v1872
  %v1874 = vmul.f32 %v1831, 1.442695
  %v1875 = vpow.pop %v1874
  %v1876 = vmul.f32 %v1832, 1.442695
  %v1877 = vpow.pop %v1876
  %v1878 = vmul.f32 %v1833, 1.442695
  %v1879 = vpow.pop %v1878
  %v1880 = vmul.f32 %v1834, 1.442695
  %v1881 = vpow.pop %v1880
  %v1882 = vmul.f32 %v1835, 1.442695
  %v1883 = vpow.pop %v1882
  %v1884 = vmul.f32 %v1836, 1.442695
  %v1885 = vpow.pop %v1884
  %v1886 = vmul.f32 %v1837, 1.442695
  %v1887 = vpow.pop %v1886
  %v1888 = vmul.f32 %v1838, 1.442695
  %v1889 = vpow.pop %v1888
  %v1890 = vmul.f32 %v1839, 1.442695
  %v1891 = vpow.pop %v1890
  %v1892 = vmul.f32 %v1840, 1.442695
  %v1893 = vpow.pop %v1892
  %v1894 = vmul.f32 %v1841, 1.442695
  %v1895 = vpow.pop %v1894
  %v1896 = vmul.f32 %v1842, 1.442695
  %v1897 = vpow.pop %v1896
  %v1898 = vmul.f32 %v1843, 1.442695
  %v1899 = vpow.pop %v1898
  %v1900 = vmul.f32 %v1844, 1.442695
  %v1901 = vpow.pop %v1900
  %v1902 = vmul.f32 %v1845, 1.442695
  %v1903 = vpow.pop %v1902
  %v1904 = vmul.f32 %v1846, 1.442695
  %v1905 = vpow.pop %v1904
  %v1906 = vmul.f32 %v1847, 1.442695
  %v1907 = vpow.pop %v1906
  %v1908 = vmul.f32 %v1848, 1.442695
  %v1909 = vpow.pop %v1908
  %v1910 = vmul.f32 %v1849, 1.442695
  %v1911 = vpow.pop %v1910
  %v1912 = vmul.f32 %v1850, 1.442695
  %v1913 = vpow.pop %v1912
  %v1914 = vmul.f32 %v1851, 1.442695
  %v1915 = vpow.pop %v1914
  %v1916 = vmul.f32 %v1852, 1.442695
  %v1917 = vpow.pop %v1916
  %v1918 = vmul.f32 %v1853, 1.442695
  %v1919 = vpow.pop %v1918
  %v1920 = vmul.f32 %v1854, 1.442695
  %v1921 = vpow.pop %v1920
  %v1922 = vmul.f32 %v1855, 1.442695
  %v1923 = vpow.pop %v1922
  %v1924 = vmul.f32 %v1856, 1.442695
  %v1925 = vpow.pop %v1924
  %v1926 = vmul.f32 %v1857, 1.442695
  %v1927 = vpow.pop %v1926
  %v1928 = vmul.f32 %v1858, 1.442695
  %v1929 = vpow.pop %v1928
  %v1930 = vmul.f32 %v1859, 1.442695
  %v1931 = vpow.pop %v1930
  %v1932 = vmul.f32 %v1860, 1.442695
  %v1933 = vpow.pop %v1932
  %v1934 = vmul.f32 %v1861, 1.442695
  %v1935 = vpow.pop %v1934
  %v1936 = vmul.f32 %v1862, 1.442695
  %v1937 = vpow.pop %v1936
  %v1938 = vmul.f32 %v1863, 1.442695
  %v1939 = vpow.pop %v1938
  %v1940 = vadd.f32 %v1865, 1.0
  %v1941 = vadd.f32 %v1867, 1.0
  %v1942 = vadd.f32 %v1869, 1.0
  %v1943 = vadd.f32 %v1871, 1.0
  %v1944 = vadd.f32 %v1873, 1.0
  %v1945 = vadd.f32 %v1875, 1.0
  %v1946 = vadd.f32 %v1877, 1.0
  %v1947 = vadd.f32 %v1879, 1.0
  %v1948 = vadd.f32 %v1881, 1.0
  %v1949 = vadd.f32 %v1883, 1.0
  %v1950 = vadd.f32 %v1885, 1.0
  %v1951 = vadd.f32 %v1887, 1.0
  %v1952 = vadd.f32 %v1889, 1.0
  %v1953 = vadd.f32 %v1891, 1.0
  %v1954 = vadd.f32 %v1893, 1.0
  %v1955 = vadd.f32 %v1895, 1.0
  %v1956 = vadd.f32 %v1897, 1.0
  %v1957 = vadd.f32 %v1899, 1.0
  %v1958 = vadd.f32 %v1901, 1.0
  %v1959 = vadd.f32 %v1903, 1.0
  %v1960 = vadd.f32 %v1905, 1.0
  %v1961 = vadd.f32 %v1907, 1.0
  %v1962 = vadd.f32 %v1909, 1.0
  %v1963 = vadd.f32 %v1911, 1.0
  %v1964 = vadd.f32 %v1913, 1.0
  %v1965 = vadd.f32 %v1915, 1.0
  %v1966 = vadd.f32 %v1917, 1.0
  %v1967 = vadd.f32 %v1919, 1.0
  %v1968 = vadd.f32 %v1921, 1.0
  %v1969 = vadd.f32 %v1923, 1.0
  %v1970 = vadd.f32 %v1925, 1.0
  %v1971 = vadd.f32 %v1927, 1.0
  %v1972 = vadd.f32 %v1929, 1.0
  %v1973 = vadd.f32 %v1931, 1.0
  %v1974 = vadd.f32 %v1933, 1.0
  %v1975 = vadd.f32 %v1935, 1.0
  %v1976 = vadd.f32 %v1937, 1.0
  %v1977 = vadd.f32 %v1939, 1.0
  %v1978 = vrcp.pop %v1940
  %v1979 = vmul.f32 %v1940, %v1978
  %v1980 = vsub.f32 1.0, %v1979
  %v1981 = vmul.f32 %v1978, %v1980
  %v1982 = vadd.f32 %v1978, %v1981
  %vm1983 = vweird.f32 %v1940
  %vm1984 = vweird.f32 %v1978
  %vm1985 = vmor %vm1983, %vm1984
  %v1986 = vsel %vm1985, %v1978, %v1982
  %v1987 = vand.u32 2147483647, %v1940
  %vm1988 = vcmp.eq.f32.partialorder %v1987, 8.507059e+37
  %v1989 = vand.u32 %v1940, 2147483648
  %v1990 = vor.u32 1.1754944e-38, %v1989
  %v1991 = vsel %vm1988, %v1990, %v1986
  %v1992 = vmul.f32 1.0, %v1991
  %v1993 = vrcp.pop %v1941
  %v1994 = vmul.f32 %v1941, %v1993
  %v1995 = vsub.f32 1.0, %v1994
  %v1996 = vmul.f32 %v1993, %v1995
  %v1997 = vadd.f32 %v1993, %v1996
  %vm1998 = vweird.f32 %v1941
  %vm1999 = vweird.f32 %v1993
  %vm2000 = vmor %vm1998, %vm1999
  %v2001 = vsel %vm2000, %v1993, %v1997
  %v2002 = vand.u32 2147483647, %v1941
  %vm2003 = vcmp.eq.f32.partialorder %v2002, 8.507059e+37
  %v2004 = vand.u32 %v1941, 2147483648
  %v2005 = vor.u32 1.1754944e-38, %v2004
  %v2006 = vsel %vm2003, %v2005, %v2001
  %v2007 = vmul.f32 1.0, %v2006
  %v2008 = vrcp.pop %v1942
  %v2009 = vmul.f32 %v1942, %v2008
  %v2010 = vsub.f32 1.0, %v2009
  %v2011 = vmul.f32 %v2008, %v2010
  %v2012 = vadd.f32 %v2008, %v2011
  %vm2013 = vweird.f32 %v1942
  %vm2014 = vweird.f32 %v2008
  %vm2015 = vmor %vm2013, %vm2014
  %v2016 = vsel %vm2015, %v2008, %v2012
  %v2017 = vand.u32 2147483647, %v1942
  %vm2018 = vcmp.eq.f32.partialorder %v2017, 8.507059e+37
  %v2019 = vand.u32 %v1942, 2147483648
  %v2020 = vor.u32 1.1754944e-38, %v2019
  %v2021 = vsel %vm2018, %v2020, %v2016
  %v2022 = vmul.f32 1.0, %v2021
  %v2023 = vrcp.pop %v1943
  %v2024 = vmul.f32 %v1943, %v2023
  %v2025 = vsub.f32 1.0, %v2024
  %v2026 = vmul.f32 %v2023, %v2025
  %v2027 = vadd.f32 %v2023, %v2026
  %vm2028 = vweird.f32 %v1943
  %vm2029 = vweird.f32 %v2023
  %vm2030 = vmor %vm2028, %vm2029
  %v2031 = vsel %vm2030, %v2023, %v2027
  %v2032 = vand.u32 2147483647, %v1943
  %vm2033 = vcmp.eq.f32.partialorder %v2032, 8.507059e+37
  %v2034 = vand.u32 %v1943, 2147483648
  %v2035 = vor.u32 1.1754944e-38, %v2034
  %v2036 = vsel %vm2033, %v2035, %v2031
  %v2037 = vmul.f32 1.0, %v2036
  %v2038 = vrcp.pop %v1944
  %v2039 = vmul.f32 %v1944, %v2038
  %v2040 = vsub.f32 1.0, %v2039
  %v2041 = vmul.f32 %v2038, %v2040
  %v2042 = vadd.f32 %v2038, %v2041
  %vm2043 = vweird.f32 %v1944
  %vm2044 = vweird.f32 %v2038
  %vm2045 = vmor %vm2043, %vm2044
  %v2046 = vsel %vm2045, %v2038, %v2042
  %v2047 = vand.u32 2147483647, %v1944
  %vm2048 = vcmp.eq.f32.partialorder %v2047, 8.507059e+37
  %v2049 = vand.u32 %v1944, 2147483648
  %v2050 = vor.u32 1.1754944e-38, %v2049
  %v2051 = vsel %vm2048, %v2050, %v2046
  %v2052 = vmul.f32 1.0, %v2051
  %v2053 = vrcp.pop %v1945
  %v2054 = vmul.f32 %v1945, %v2053
  %v2055 = vsub.f32 1.0, %v2054
  %v2056 = vmul.f32 %v2053, %v2055
  %v2057 = vadd.f32 %v2053, %v2056
  %vm2058 = vweird.f32 %v1945
  %vm2059 = vweird.f32 %v2053
  %vm2060 = vmor %vm2058, %vm2059
  %v2061 = vsel %vm2060, %v2053, %v2057
  %v2062 = vand.u32 2147483647, %v1945
  %vm2063 = vcmp.eq.f32.partialorder %v2062, 8.507059e+37
  %v2064 = vand.u32 %v1945, 2147483648
  %v2065 = vor.u32 1.1754944e-38, %v2064
  %v2066 = vsel %vm2063, %v2065, %v2061
  %v2067 = vmul.f32 1.0, %v2066
  %v2068 = vrcp.pop %v1946
  %v2069 = vmul.f32 %v1946, %v2068
  %v2070 = vsub.f32 1.0, %v2069
  %v2071 = vmul.f32 %v2068, %v2070
  %v2072 = vadd.f32 %v2068, %v2071
  %vm2073 = vweird.f32 %v1946
  %vm2074 = vweird.f32 %v2068
  %vm2075 = vmor %vm2073, %vm2074
  %v2076 = vsel %vm2075, %v2068, %v2072
  %v2077 = vand.u32 2147483647, %v1946
  %vm2078 = vcmp.eq.f32.partialorder %v2077, 8.507059e+37
  %v2079 = vand.u32 %v1946, 2147483648
  %v2080 = vor.u32 1.1754944e-38, %v2079
  %v2081 = vsel %vm2078, %v2080, %v2076
  %v2082 = vmul.f32 1.0, %v2081
  %v2083 = vrcp.pop %v1947
  %v2084 = vmul.f32 %v1947, %v2083
  %v2085 = vsub.f32 1.0, %v2084
  %v2086 = vmul.f32 %v2083, %v2085
  %v2087 = vadd.f32 %v2083, %v2086
  %vm2088 = vweird.f32 %v1947
  %vm2089 = vweird.f32 %v2083
  %vm2090 = vmor %vm2088, %vm2089
  %v2091 = vsel %vm2090, %v2083, %v2087
  %v2092 = vand.u32 2147483647, %v1947
  %vm2093 = vcmp.eq.f32.partialorder %v2092, 8.507059e+37
  %v2094 = vand.u32 %v1947, 2147483648
  %v2095 = vor.u32 1.1754944e-38, %v2094
  %v2096 = vsel %vm2093, %v2095, %v2091
  %v2097 = vmul.f32 1.0, %v2096
  %v2098 = vrcp.pop %v1948
  %v2099 = vmul.f32 %v1948, %v2098
  %v2100 = vsub.f32 1.0, %v2099
  %v2101 = vmul.f32 %v2098, %v2100
  %v2102 = vadd.f32 %v2098, %v2101
  %vm2103 = vweird.f32 %v1948
  %vm2104 = vweird.f32 %v2098
  %vm2105 = vmor %vm2103, %vm2104
  %v2106 = vsel %vm2105, %v2098, %v2102
  %v2107 = vand.u32 2147483647, %v1948
  %vm2108 = vcmp.eq.f32.partialorder %v2107, 8.507059e+37
  %v2109 = vand.u32 %v1948, 2147483648
  %v2110 = vor.u32 1.1754944e-38, %v2109
  %v2111 = vsel %vm2108, %v2110, %v2106
  %v2112 = vmul.f32 1.0, %v2111
  %v2113 = vrcp.pop %v1949
  %v2114 = vmul.f32 %v1949, %v2113
  %v2115 = vsub.f32 1.0, %v2114
  %v2116 = vmul.f32 %v2113, %v2115
  %v2117 = vadd.f32 %v2113, %v2116
  %vm2118 = vweird.f32 %v1949
  %vm2119 = vweird.f32 %v2113
  %vm2120 = vmor %vm2118, %vm2119
  %v2121 = vsel %vm2120, %v2113, %v2117
  %v2122 = vand.u32 2147483647, %v1949
  %vm2123 = vcmp.eq.f32.partialorder %v2122, 8.507059e+37
  %v2124 = vand.u32 %v1949, 2147483648
  %v2125 = vor.u32 1.1754944e-38, %v2124
  %v2126 = vsel %vm2123, %v2125, %v2121
  %v2127 = vmul.f32 1.0, %v2126
  %v2128 = vrcp.pop %v1950
  %v2129 = vmul.f32 %v1950, %v2128
  %v2130 = vsub.f32 1.0, %v2129
  %v2131 = vmul.f32 %v2128, %v2130
  %v2132 = vadd.f32 %v2128, %v2131
  %vm2133 = vweird.f32 %v1950
  %vm2134 = vweird.f32 %v2128
  %vm2135 = vmor %vm2133, %vm2134
  %v2136 = vsel %vm2135, %v2128, %v2132
  %v2137 = vand.u32 2147483647, %v1950
  %vm2138 = vcmp.eq.f32.partialorder %v2137, 8.507059e+37
  %v2139 = vand.u32 %v1950, 2147483648
  %v2140 = vor.u32 1.1754944e-38, %v2139
  %v2141 = vsel %vm2138, %v2140, %v2136
  %v2142 = vmul.f32 1.0, %v2141
  %v2143 = vrcp.pop %v1951
  %v2144 = vmul.f32 %v1951, %v2143
  %v2145 = vsub.f32 1.0, %v2144
  %v2146 = vmul.f32 %v2143, %v2145
  %v2147 = vadd.f32 %v2143, %v2146
  %vm2148 = vweird.f32 %v1951
  %vm2149 = vweird.f32 %v2143
  %vm2150 = vmor %vm2148, %vm2149
  %v2151 = vsel %vm2150, %v2143, %v2147
  %v2152 = vand.u32 2147483647, %v1951
  %vm2153 = vcmp.eq.f32.partialorder %v2152, 8.507059e+37
  %v2154 = vand.u32 %v1951, 2147483648
  %v2155 = vor.u32 1.1754944e-38, %v2154
  %v2156 = vsel %vm2153, %v2155, %v2151
  %v2157 = vmul.f32 1.0, %v2156
  %v2158 = vrcp.pop %v1952
  %v2159 = vmul.f32 %v1952, %v2158
  %v2160 = vsub.f32 1.0, %v2159
  %v2161 = vmul.f32 %v2158, %v2160
  %v2162 = vadd.f32 %v2158, %v2161
  %vm2163 = vweird.f32 %v1952
  %vm2164 = vweird.f32 %v2158
  %vm2165 = vmor %vm2163, %vm2164
  %v2166 = vsel %vm2165, %v2158, %v2162
  %v2167 = vand.u32 2147483647, %v1952
  %vm2168 = vcmp.eq.f32.partialorder %v2167, 8.507059e+37
  %v2169 = vand.u32 %v1952, 2147483648
  %v2170 = vor.u32 1.1754944e-38, %v2169
  %v2171 = vsel %vm2168, %v2170, %v2166
  %v2172 = vmul.f32 1.0, %v2171
  %v2173 = vrcp.pop %v1953
  %v2174 = vmul.f32 %v1953, %v2173
  %v2175 = vsub.f32 1.0, %v2174
  %v2176 = vmul.f32 %v2173, %v2175
  %v2177 = vadd.f32 %v2173, %v2176
  %vm2178 = vweird.f32 %v1953
  %vm2179 = vweird.f32 %v2173
  %vm2180 = vmor %vm2178, %vm2179
  %v2181 = vsel %vm2180, %v2173, %v2177
  %v2182 = vand.u32 2147483647, %v1953
  %vm2183 = vcmp.eq.f32.partialorder %v2182, 8.507059e+37
  %v2184 = vand.u32 %v1953, 2147483648
  %v2185 = vor.u32 1.1754944e-38, %v2184
  %v2186 = vsel %vm2183, %v2185, %v2181
  %v2187 = vmul.f32 1.0, %v2186
  %v2188 = vrcp.pop %v1954
  %v2189 = vmul.f32 %v1954, %v2188
  %v2190 = vsub.f32 1.0, %v2189
  %v2191 = vmul.f32 %v2188, %v2190
  %v2192 = vadd.f32 %v2188, %v2191
  %vm2193 = vweird.f32 %v1954
  %vm2194 = vweird.f32 %v2188
  %vm2195 = vmor %vm2193, %vm2194
  %v2196 = vsel %vm2195, %v2188, %v2192
  %v2197 = vand.u32 2147483647, %v1954
  %vm2198 = vcmp.eq.f32.partialorder %v2197, 8.507059e+37
  %v2199 = vand.u32 %v1954, 2147483648
  %v2200 = vor.u32 1.1754944e-38, %v2199
  %v2201 = vsel %vm2198, %v2200, %v2196
  %v2202 = vmul.f32 1.0, %v2201
  %v2203 = vrcp.pop %v1955
  %v2204 = vmul.f32 %v1955, %v2203
  %v2205 = vsub.f32 1.0, %v2204
  %v2206 = vmul.f32 %v2203, %v2205
  %v2207 = vadd.f32 %v2203, %v2206
  %vm2208 = vweird.f32 %v1955
  %vm2209 = vweird.f32 %v2203
  %vm2210 = vmor %vm2208, %vm2209
  %v2211 = vsel %vm2210, %v2203, %v2207
  %v2212 = vand.u32 2147483647, %v1955
  %vm2213 = vcmp.eq.f32.partialorder %v2212, 8.507059e+37
  %v2214 = vand.u32 %v1955, 2147483648
  %v2215 = vor.u32 1.1754944e-38, %v2214
  %v2216 = vsel %vm2213, %v2215, %v2211
  %v2217 = vmul.f32 1.0, %v2216
  %v2218 = vrcp.pop %v1956
  %v2219 = vmul.f32 %v1956, %v2218
  %v2220 = vsub.f32 1.0, %v2219
  %v2221 = vmul.f32 %v2218, %v2220
  %v2222 = vadd.f32 %v2218, %v2221
  %vm2223 = vweird.f32 %v1956
  %vm2224 = vweird.f32 %v2218
  %vm2225 = vmor %vm2223, %vm2224
  %v2226 = vsel %vm2225, %v2218, %v2222
  %v2227 = vand.u32 2147483647, %v1956
  %vm2228 = vcmp.eq.f32.partialorder %v2227, 8.507059e+37
  %v2229 = vand.u32 %v1956, 2147483648
  %v2230 = vor.u32 1.1754944e-38, %v2229
  %v2231 = vsel %vm2228, %v2230, %v2226
  %v2232 = vmul.f32 1.0, %v2231
  %v2233 = vrcp.pop %v1957
  %v2234 = vmul.f32 %v1957, %v2233
  %v2235 = vsub.f32 1.0, %v2234
  %v2236 = vmul.f32 %v2233, %v2235
  %v2237 = vadd.f32 %v2233, %v2236
  %vm2238 = vweird.f32 %v1957
  %vm2239 = vweird.f32 %v2233
  %vm2240 = vmor %vm2238, %vm2239
  %v2241 = vsel %vm2240, %v2233, %v2237
  %v2242 = vand.u32 2147483647, %v1957
  %vm2243 = vcmp.eq.f32.partialorder %v2242, 8.507059e+37
  %v2244 = vand.u32 %v1957, 2147483648
  %v2245 = vor.u32 1.1754944e-38, %v2244
  %v2246 = vsel %vm2243, %v2245, %v2241
  %v2247 = vmul.f32 1.0, %v2246
  %v2248 = vrcp.pop %v1958
  %v2249 = vmul.f32 %v1958, %v2248
  %v2250 = vsub.f32 1.0, %v2249
  %v2251 = vmul.f32 %v2248, %v2250
  %v2252 = vadd.f32 %v2248, %v2251
  %vm2253 = vweird.f32 %v1958
  %vm2254 = vweird.f32 %v2248
  %vm2255 = vmor %vm2253, %vm2254
  %v2256 = vsel %vm2255, %v2248, %v2252
  %v2257 = vand.u32 2147483647, %v1958
  %vm2258 = vcmp.eq.f32.partialorder %v2257, 8.507059e+37
  %v2259 = vand.u32 %v1958, 2147483648
  %v2260 = vor.u32 1.1754944e-38, %v2259
  %v2261 = vsel %vm2258, %v2260, %v2256
  %v2262 = vmul.f32 1.0, %v2261
  %v2263 = vrcp.pop %v1959
  %v2264 = vmul.f32 %v1959, %v2263
  %v2265 = vsub.f32 1.0, %v2264
  %v2266 = vmul.f32 %v2263, %v2265
  %v2267 = vadd.f32 %v2263, %v2266
  %vm2268 = vweird.f32 %v1959
  %vm2269 = vweird.f32 %v2263
  %vm2270 = vmor %vm2268, %vm2269
  %v2271 = vsel %vm2270, %v2263, %v2267
  %v2272 = vand.u32 2147483647, %v1959
  %vm2273 = vcmp.eq.f32.partialorder %v2272, 8.507059e+37
  %v2274 = vand.u32 %v1959, 2147483648
  %v2275 = vor.u32 1.1754944e-38, %v2274
  %v2276 = vsel %vm2273, %v2275, %v2271
  %v2277 = vmul.f32 1.0, %v2276
  %v2278 = vrcp.pop %v1960
  %v2279 = vmul.f32 %v1960, %v2278
  %v2280 = vsub.f32 1.0, %v2279
  %v2281 = vmul.f32 %v2278, %v2280
  %v2282 = vadd.f32 %v2278, %v2281
  %vm2283 = vweird.f32 %v1960
  %vm2284 = vweird.f32 %v2278
  %vm2285 = vmor %vm2283, %vm2284
  %v2286 = vsel %vm2285, %v2278, %v2282
  %v2287 = vand.u32 2147483647, %v1960
  %vm2288 = vcmp.eq.f32.partialorder %v2287, 8.507059e+37
  %v2289 = vand.u32 %v1960, 2147483648
  %v2290 = vor.u32 1.1754944e-38, %v2289
  %v2291 = vsel %vm2288, %v2290, %v2286
  %v2292 = vmul.f32 1.0, %v2291
  %v2293 = vrcp.pop %v1961
  %v2294 = vmul.f32 %v1961, %v2293
  %v2295 = vsub.f32 1.0, %v2294
  %v2296 = vmul.f32 %v2293, %v2295
  %v2297 = vadd.f32 %v2293, %v2296
  %vm2298 = vweird.f32 %v1961
  %vm2299 = vweird.f32 %v2293
  %vm2300 = vmor %vm2298, %vm2299
  %v2301 = vsel %vm2300, %v2293, %v2297
  %v2302 = vand.u32 2147483647, %v1961
  %vm2303 = vcmp.eq.f32.partialorder %v2302, 8.507059e+37
  %v2304 = vand.u32 %v1961, 2147483648
  %v2305 = vor.u32 1.1754944e-38, %v2304
  %v2306 = vsel %vm2303, %v2305, %v2301
  %v2307 = vmul.f32 1.0, %v2306
  %v2308 = vrcp.pop %v1962
  %v2309 = vmul.f32 %v1962, %v2308
  %v2310 = vsub.f32 1.0, %v2309
  %v2311 = vmul.f32 %v2308, %v2310
  %v2312 = vadd.f32 %v2308, %v2311
  %vm2313 = vweird.f32 %v1962
  %vm2314 = vweird.f32 %v2308
  %vm2315 = vmor %vm2313, %vm2314
  %v2316 = vsel %vm2315, %v2308, %v2312
  %v2317 = vand.u32 2147483647, %v1962
  %vm2318 = vcmp.eq.f32.partialorder %v2317, 8.507059e+37
  %v2319 = vand.u32 %v1962, 2147483648
  %v2320 = vor.u32 1.1754944e-38, %v2319
  %v2321 = vsel %vm2318, %v2320, %v2316
  %v2322 = vmul.f32 1.0, %v2321
  %v2323 = vrcp.pop %v1963
  %v2324 = vmul.f32 %v1963, %v2323
  %v2325 = vsub.f32 1.0, %v2324
  %v2326 = vmul.f32 %v2323, %v2325
  %v2327 = vadd.f32 %v2323, %v2326
  %vm2328 = vweird.f32 %v1963
  %vm2329 = vweird.f32 %v2323
  %vm2330 = vmor %vm2328, %vm2329
  %v2331 = vsel %vm2330, %v2323, %v2327
  %v2332 = vand.u32 2147483647, %v1963
  %vm2333 = vcmp.eq.f32.partialorder %v2332, 8.507059e+37
  %v2334 = vand.u32 %v1963, 2147483648
  %v2335 = vor.u32 1.1754944e-38, %v2334
  %v2336 = vsel %vm2333, %v2335, %v2331
  %v2337 = vmul.f32 1.0, %v2336
  %v2338 = vrcp.pop %v1964
  %v2339 = vmul.f32 %v1964, %v2338
  %v2340 = vsub.f32 1.0, %v2339
  %v2341 = vmul.f32 %v2338, %v2340
  %v2342 = vadd.f32 %v2338, %v2341
  %vm2343 = vweird.f32 %v1964
  %vm2344 = vweird.f32 %v2338
  %vm2345 = vmor %vm2343, %vm2344
  %v2346 = vsel %vm2345, %v2338, %v2342
  %v2347 = vand.u32 2147483647, %v1964
  %vm2348 = vcmp.eq.f32.partialorder %v2347, 8.507059e+37
  %v2349 = vand.u32 %v1964, 2147483648
  %v2350 = vor.u32 1.1754944e-38, %v2349
  %v2351 = vsel %vm2348, %v2350, %v2346
  %v2352 = vmul.f32 1.0, %v2351
  %v2353 = vrcp.pop %v1965
  %v2354 = vmul.f32 %v1965, %v2353
  %v2355 = vsub.f32 1.0, %v2354
  %v2356 = vmul.f32 %v2353, %v2355
  %v2357 = vadd.f32 %v2353, %v2356
  %vm2358 = vweird.f32 %v1965
  %vm2359 = vweird.f32 %v2353
  %vm2360 = vmor %vm2358, %vm2359
  %v2361 = vsel %vm2360, %v2353, %v2357
  %v2362 = vand.u32 2147483647, %v1965
  %vm2363 = vcmp.eq.f32.partialorder %v2362, 8.507059e+37
  %v2364 = vand.u32 %v1965, 2147483648
  %v2365 = vor.u32 1.1754944e-38, %v2364
  %v2366 = vsel %vm2363, %v2365, %v2361
  %v2367 = vmul.f32 1.0, %v2366
  %v2368 = vrcp.pop %v1966
  %v2369 = vmul.f32 %v1966, %v2368
  %v2370 = vsub.f32 1.0, %v2369
  %v2371 = vmul.f32 %v2368, %v2370
  %v2372 = vadd.f32 %v2368, %v2371
  %vm2373 = vweird.f32 %v1966
  %vm2374 = vweird.f32 %v2368
  %vm2375 = vmor %vm2373, %vm2374
  %v2376 = vsel %vm2375, %v2368, %v2372
  %v2377 = vand.u32 2147483647, %v1966
  %vm2378 = vcmp.eq.f32.partialorder %v2377, 8.507059e+37
  %v2379 = vand.u32 %v1966, 2147483648
  %v2380 = vor.u32 1.1754944e-38, %v2379
  %v2381 = vsel %vm2378, %v2380, %v2376
  %v2382 = vmul.f32 1.0, %v2381
  %v2383 = vrcp.pop %v1967
  %v2384 = vmul.f32 %v1967, %v2383
  %v2385 = vsub.f32 1.0, %v2384
  %v2386 = vmul.f32 %v2383, %v2385
  %v2387 = vadd.f32 %v2383, %v2386
  %vm2388 = vweird.f32 %v1967
  %vm2389 = vweird.f32 %v2383
  %vm2390 = vmor %vm2388, %vm2389
  %v2391 = vsel %vm2390, %v2383, %v2387
  %v2392 = vand.u32 2147483647, %v1967
  %vm2393 = vcmp.eq.f32.partialorder %v2392, 8.507059e+37
  %v2394 = vand.u32 %v1967, 2147483648
  %v2395 = vor.u32 1.1754944e-38, %v2394
  %v2396 = vsel %vm2393, %v2395, %v2391
  %v2397 = vmul.f32 1.0, %v2396
  %v2398 = vrcp.pop %v1968
  %v2399 = vmul.f32 %v1968, %v2398
  %v2400 = vsub.f32 1.0, %v2399
  %v2401 = vmul.f32 %v2398, %v2400
  %v2402 = vadd.f32 %v2398, %v2401
  %vm2403 = vweird.f32 %v1968
  %vm2404 = vweird.f32 %v2398
  %vm2405 = vmor %vm2403, %vm2404
  %v2406 = vsel %vm2405, %v2398, %v2402
  %v2407 = vand.u32 2147483647, %v1968
  %vm2408 = vcmp.eq.f32.partialorder %v2407, 8.507059e+37
  %v2409 = vand.u32 %v1968, 2147483648
  %v2410 = vor.u32 1.1754944e-38, %v2409
  %v2411 = vsel %vm2408, %v2410, %v2406
  %v2412 = vmul.f32 1.0, %v2411
  %v2413 = vrcp.pop %v1969
  %v2414 = vmul.f32 %v1969, %v2413
  %v2415 = vsub.f32 1.0, %v2414
  %v2416 = vmul.f32 %v2413, %v2415
  %v2417 = vadd.f32 %v2413, %v2416
  %vm2418 = vweird.f32 %v1969
  %vm2419 = vweird.f32 %v2413
  %vm2420 = vmor %vm2418, %vm2419
  %v2421 = vsel %vm2420, %v2413, %v2417
  %v2422 = vand.u32 2147483647, %v1969
  %vm2423 = vcmp.eq.f32.partialorder %v2422, 8.507059e+37
  %v2424 = vand.u32 %v1969, 2147483648
  %v2425 = vor.u32 1.1754944e-38, %v2424
  %v2426 = vsel %vm2423, %v2425, %v2421
  %v2427 = vmul.f32 1.0, %v2426
  %v2428 = vrcp.pop %v1970
  %v2429 = vmul.f32 %v1970, %v2428
  %v2430 = vsub.f32 1.0, %v2429
  %v2431 = vmul.f32 %v2428, %v2430
  %v2432 = vadd.f32 %v2428, %v2431
  %vm2433 = vweird.f32 %v1970
  %vm2434 = vweird.f32 %v2428
  %vm2435 = vmor %vm2433, %vm2434
  %v2436 = vsel %vm2435, %v2428, %v2432
  %v2437 = vand.u32 2147483647, %v1970
  %vm2438 = vcmp.eq.f32.partialorder %v2437, 8.507059e+37
  %v2439 = vand.u32 %v1970, 2147483648
  %v2440 = vor.u32 1.1754944e-38, %v2439
  %v2441 = vsel %vm2438, %v2440, %v2436
  %v2442 = vmul.f32 1.0, %v2441
  %v2443 = vrcp.pop %v1971
  %v2444 = vmul.f32 %v1971, %v2443
  %v2445 = vsub.f32 1.0, %v2444
  %v2446 = vmul.f32 %v2443, %v2445
  %v2447 = vadd.f32 %v2443, %v2446
  %vm2448 = vweird.f32 %v1971
  %vm2449 = vweird.f32 %v2443
  %vm2450 = vmor %vm2448, %vm2449
  %v2451 = vsel %vm2450, %v2443, %v2447
  %v2452 = vand.u32 2147483647, %v1971
  %vm2453 = vcmp.eq.f32.partialorder %v2452, 8.507059e+37
  %v2454 = vand.u32 %v1971, 2147483648
  %v2455 = vor.u32 1.1754944e-38, %v2454
  %v2456 = vsel %vm2453, %v2455, %v2451
  %v2457 = vmul.f32 1.0, %v2456
  %v2458 = vrcp.pop %v1972
  %v2459 = vmul.f32 %v1972, %v2458
  %v2460 = vsub.f32 1.0, %v2459
  %v2461 = vmul.f32 %v2458, %v2460
  %v2462 = vadd.f32 %v2458, %v2461
  %vm2463 = vweird.f32 %v1972
  %vm2464 = vweird.f32 %v2458
  %vm2465 = vmor %vm2463, %vm2464
  %v2466 = vsel %vm2465, %v2458, %v2462
  %v2467 = vand.u32 2147483647, %v1972
  %vm2468 = vcmp.eq.f32.partialorder %v2467, 8.507059e+37
  %v2469 = vand.u32 %v1972, 2147483648
  %v2470 = vor.u32 1.1754944e-38, %v2469
  %v2471 = vsel %vm2468, %v2470, %v2466
  %v2472 = vmul.f32 1.0, %v2471
  %v2473 = vrcp.pop %v1973
  %v2474 = vmul.f32 %v1973, %v2473
  %v2475 = vsub.f32 1.0, %v2474
  %v2476 = vmul.f32 %v2473, %v2475
  %v2477 = vadd.f32 %v2473, %v2476
  %vm2478 = vweird.f32 %v1973
  %vm2479 = vweird.f32 %v2473
  %vm2480 = vmor %vm2478, %vm2479
  %v2481 = vsel %vm2480, %v2473, %v2477
  %v2482 = vand.u32 2147483647, %v1973
  %vm2483 = vcmp.eq.f32.partialorder %v2482, 8.507059e+37
  %v2484 = vand.u32 %v1973, 2147483648
  %v2485 = vor.u32 1.1754944e-38, %v2484
  %v2486 = vsel %vm2483, %v2485, %v2481
  %v2487 = vmul.f32 1.0, %v2486
  %v2488 = vrcp.pop %v1974
  %v2489 = vmul.f32 %v1974, %v2488
  %v2490 = vsub.f32 1.0, %v2489
  %v2491 = vmul.f32 %v2488, %v2490
  %v2492 = vadd.f32 %v2488, %v2491
  %vm2493 = vweird.f32 %v1974
  %vm2494 = vweird.f32 %v2488
  %vm2495 = vmor %vm2493, %vm2494
  %v2496 = vsel %vm2495, %v2488, %v2492
  %v2497 = vand.u32 2147483647, %v1974
  %vm2498 = vcmp.eq.f32.partialorder %v2497, 8.507059e+37
  %v2499 = vand.u32 %v1974, 2147483648
  %v2500 = vor.u32 1.1754944e-38, %v2499
  %v2501 = vsel %vm2498, %v2500, %v2496
  %v2502 = vmul.f32 1.0, %v2501
  %v2503 = vrcp.pop %v1975
  %v2504 = vmul.f32 %v1975, %v2503
  %v2505 = vsub.f32 1.0, %v2504
  %v2506 = vmul.f32 %v2503, %v2505
  %v2507 = vadd.f32 %v2503, %v2506
  %vm2508 = vweird.f32 %v1975
  %vm2509 = vweird.f32 %v2503
  %vm2510 = vmor %vm2508, %vm2509
  %v2511 = vsel %vm2510, %v2503, %v2507
  %v2512 = vand.u32 2147483647, %v1975
  %vm2513 = vcmp.eq.f32.partialorder %v2512, 8.507059e+37
  %v2514 = vand.u32 %v1975, 2147483648
  %v2515 = vor.u32 1.1754944e-38, %v2514
  %v2516 = vsel %vm2513, %v2515, %v2511
  %v2517 = vmul.f32 1.0, %v2516
  %v2518 = vrcp.pop %v1976
  %v2519 = vmul.f32 %v1976, %v2518
  %v2520 = vsub.f32 1.0, %v2519
  %v2521 = vmul.f32 %v2518, %v2520
  %v2522 = vadd.f32 %v2518, %v2521
  %vm2523 = vweird.f32 %v1976
  %vm2524 = vweird.f32 %v2518
  %vm2525 = vmor %vm2523, %vm2524
  %v2526 = vsel %vm2525, %v2518, %v2522
  %v2527 = vand.u32 2147483647, %v1976
  %vm2528 = vcmp.eq.f32.partialorder %v2527, 8.507059e+37
  %v2529 = vand.u32 %v1976, 2147483648
  %v2530 = vor.u32 1.1754944e-38, %v2529
  %v2531 = vsel %vm2528, %v2530, %v2526
  %v2532 = vmul.f32 1.0, %v2531
  %v2533 = vrcp.pop %v1977
  %v2534 = vmul.f32 %v1977, %v2533
  %v2535 = vsub.f32 1.0, %v2534
  %v2536 = vmul.f32 %v2533, %v2535
  %v2537 = vadd.f32 %v2533, %v2536
  %vm2538 = vweird.f32 %v1977
  %vm2539 = vweird.f32 %v2533
  %vm2540 = vmor %vm2538, %vm2539
  %v2541 = vsel %vm2540, %v2533, %v2537
  %v2542 = vand.u32 2147483647, %v1977
  %vm2543 = vcmp.eq.f32.partialorder %v2542, 8.507059e+37
  %v2544 = vand.u32 %v1977, 2147483648
  %v2545 = vor.u32 1.1754944e-38, %v2544
  %v2546 = vsel %vm2543, %v2545, %v2541
  %v2547 = vmul.f32 1.0, %v2546
  %vm2548 = vcmask 7168
  %2549 = vst.msk [vmem:[%s5] sm:$0xff] %vm2548, %v1992
  %2550 = vst.msk [vmem:[%s5 + $0x8] sm:$0xff] %vm2548, %v2007
  %2551 = vst.msk [vmem:[%s5 + $0x10] sm:$0xff] %vm2548, %v2022
  %2552 = vst.msk [vmem:[%s5 + $0x18] sm:$0xff] %vm2548, %v2037
  %2553 = vst.msk [vmem:[%s5 + $0x20] sm:$0xff] %vm2548, %v2052
  %2554 = vst.msk [vmem:[%s5 + $0x28] sm:$0xff] %vm2548, %v2067
  %2555 = vst.msk [vmem:[%s5 + $0x30] sm:$0xff] %vm2548, %v2082
  %2556 = vst.msk [vmem:[%s5 + $0x38] sm:$0xff] %vm2548, %v2097
  %2557 = vst.msk [vmem:[%s5 + $0x40] sm:$0xff] %vm2548, %v2112
  %2558 = vst.msk [vmem:[%s5 + $0x48] sm:$0xff] %vm2548, %v2127
  %2559 = vst.msk [vmem:[%s5 + $0x50] sm:$0xff] %vm2548, %v2142
  %2560 = vst.msk [vmem:[%s5 + $0x58] sm:$0xff] %vm2548, %v2157
  %2561 = vst.msk [vmem:[%s5 + $0x60] sm:$0xff] %vm2548, %v2172
  %2562 = vst.msk [vmem:[%s5 + $0x68] sm:$0xff] %vm2548, %v2187
  %2563 = vst.msk [vmem:[%s5 + $0x70] sm:$0xff] %vm2548, %v2202
  %2564 = vst.msk [vmem:[%s5 + $0x78] sm:$0xff] %vm2548, %v2217
  %2565 = vst.msk [vmem:[%s5 + $0x80] sm:$0xff] %vm2548, %v2232
  %2566 = vst.msk [vmem:[%s5 + $0x88] sm:$0xff] %vm2548, %v2247
  %2567 = vst.msk [vmem:[%s5 + $0x90] sm:$0xff] %vm2548, %v2262
  %2568 = vst.msk [vmem:[%s5 + $0x98] sm:$0xff] %vm2548, %v2277
  %2569 = vst.msk [vmem:[%s5 + $0xa0] sm:$0xff] %vm2548, %v2292
  %2570 = vst.msk [vmem:[%s5 + $0xa8] sm:$0xff] %vm2548, %v2307
  %2571 = vst.msk [vmem:[%s5 + $0xb0] sm:$0xff] %vm2548, %v2322
  %2572 = vst.msk [vmem:[%s5 + $0xb8] sm:$0xff] %vm2548, %v2337
  %2573 = vst.msk [vmem:[%s5 + $0xc0] sm:$0xff] %vm2548, %v2352
  %2574 = vst.msk [vmem:[%s5 + $0xc8] sm:$0xff] %vm2548, %v2367
  %2575 = vst.msk [vmem:[%s5 + $0xd0] sm:$0xff] %vm2548, %v2382
  %2576 = vst.msk [vmem:[%s5 + $0xd8] sm:$0xff] %vm2548, %v2397
  %2577 = vst.msk [vmem:[%s5 + $0xe0] sm:$0xff] %vm2548, %v2412
  %2578 = vst.msk [vmem:[%s5 + $0xe8] sm:$0xff] %vm2548, %v2427
  %2579 = vst.msk [vmem:[%s5 + $0xf0] sm:$0xff] %vm2548, %v2442
  %2580 = vst.msk [vmem:[%s5 + $0xf8] sm:$0xff] %vm2548, %v2457
  %2581 = vst.msk [vmem:[%s5 + $0x100] sm:$0xff] %vm2548, %v2472
  %2582 = vst.msk [vmem:[%s5 + $0x108] sm:$0xff] %vm2548, %v2487
  %2583 = vst.msk [vmem:[%s5 + $0x110] sm:$0xff] %vm2548, %v2502
  %2584 = vst.msk [vmem:[%s5 + $0x118] sm:$0xff] %vm2548, %v2517
  %2585 = vst.msk [vmem:[%s5 + $0x120] sm:$0xff] %vm2548, %v2532
  %2586 = vst.msk [vmem:[%s5 + $0x128] sm:$0xff] %vm2548, %v2547
  // Predicated region
  $region22: #{predictor_forward.1} parent=0 // pred_check
    _
  $region23: #{predictor_forward.1} parent=0 // pred_check_branch
    %2588 = sbr.rel (0) target = $region25
  $region24: #{predictor_forward.1} parent=0 // pred_region
    _
  $region25: #{predictor_forward.1} parent=0 // pred_fallthru
    _
  // Predicated region
  $region26: #{predictor_forward.1} parent=0 // pred_check
    _
  $region27: #{predictor_forward.1} parent=0 // pred_check_branch
    %2590 = sbr.rel (0) target = $region29
  $region28: #{predictor_forward.1} parent=0 // pred_region
    _
  $region29: #{predictor_forward.1} parent=0 // pred_fallthru
    _

</llo_original>
